<compile_context>
chip_gen: v7x
topology: tpu7x:2x2x1
jax: 0.10.0
libtpu: 0.0.40
codegen_flags: <defaults>
</compile_context>

<pallas_src>
from functools import partial

import jax
import jax.numpy as jnp
from jax.experimental import pallas as pl
from jax.experimental.pallas import tpu as pltpu

EPS = 1e-5
PAD_L = 8  # left W-pad of the conv scratch so interior stores are sublane-aligned


def _down_kernel(x_ref, w1_ref, b1_ref, w2_ref, b2_ref, out_ref, pad1, pad2):
    """Per-image fused kernel.

    x_ref   : (Hp, 2, Wp, 2*Cin) f32  NHWC image, H split into (Hp,2),
                                      (W,C) merged so the 2x2 pool is slice+max
    w1_ref  : (9*Cin, Cmid)  mm-dtype im2col conv1 weights (BN1 scale folded in)
    b1_ref  : (1, Cmid) f32           folded BN1 shift
    w2_ref  : (9*Cmid, Cout) mm-dtype im2col conv2 weights (BN2 scale folded in)
    b2_ref  : (1, Cout) f32           folded BN2 shift
    out_ref : (Cout, Hp*Wp) f32       lane-dense output (spatial on lanes)
    pad1    : VMEM (Hp+2, Wp+2*PAD_L, Cin)  mm-dtype zero-bordered pooled act.
    pad2    : VMEM (Hp+2, Wp+2*PAD_L, Cmid) mm-dtype zero-bordered conv1 act.
    """
    Hp, _, Wp, two_cin = x_ref.shape
    Cin = two_cin // 2
    Cmid = w1_ref.shape[1]
    mm_dtype = w1_ref.dtype

    # ---- MaxPool2d(2): vertical max over the size-2 axis, horizontal max
    # over the two channel-blocks packed on the lane axis ----
    x = x_ref[...]                                         # (Hp, 2, Wp, 2*Cin)
    m = jnp.maximum(x[:, 0], x[:, 1])                      # (Hp, Wp, 2*Cin)
    pooled = jnp.maximum(m[:, :, :Cin], m[:, :, Cin:])     # (Hp, Wp, Cin)

    def zero_border(pad):
        # Only the halo read by the 3x3 taps needs zeros (interior is fully
        # overwritten).  All four stores are aligned block stores when
        # Wp % 8 == 0.  Re-done every step: per-core scratch + megacore means
        # we cannot rely on program_id==0 having run on this core.
        C = pad.shape[2]
        zblk = jnp.zeros((Hp + 2, PAD_L, C), pad.dtype)
        pad[:, 0:PAD_L, :] = zblk                              # left pad cols
        pad[:, PAD_L + Wp:PAD_L + Wp + PAD_L, :] = zblk        # right pad cols
        zrow = jnp.zeros((1, Wp, C), pad.dtype)
        pad[0:1, PAD_L:PAD_L + Wp, :] = zrow                   # top halo row
        pad[Hp + 1:Hp + 2, PAD_L:PAD_L + Wp, :] = zrow         # bottom halo row

    def conv3x3(pad, w_ref, C):
        # Accumulating matmul grouped by ky: 3 matmuls with K = 3*C against
        # static row-blocks of the im2col weight (no 9C patches buffer).
        cout = w_ref.shape[1]
        acc = jnp.zeros((Hp * Wp, cout), jnp.float32)
        for ky in range(3):
            taps = [pad[ky:ky + Hp, PAD_L - 1 + kx:PAD_L - 1 + kx + Wp, :]
                    for kx in range(3)]
            patch = jnp.concatenate(taps, axis=-1)             # (Hp, Wp, 3C)
            patch = patch.reshape(Hp * Wp, 3 * C)  # layout no-op iff Wp%8==0
            w_blk = w_ref[ky * 3 * C:(ky + 1) * 3 * C, :]      # (3C, cout)
            acc = acc + jnp.dot(patch, w_blk,
                                preferred_element_type=jnp.float32)
        return acc

    # ---- conv1 (3x3, pad 1, no bias, BN1 scale folded) + shift + ReLU ----
    zero_border(pad1)
    pad1[1:Hp + 1, PAD_L:PAD_L + Wp, :] = pooled.astype(mm_dtype)
    h1 = conv3x3(pad1, w1_ref, Cin)                            # (Hp*Wp, Cmid) f32
    h1 = jnp.maximum(h1 + b1_ref[...], 0.0)

    # ---- conv2 (3x3, pad 1, no bias, BN2 scale folded) + shift + ReLU ----
    zero_border(pad2)
    pad2[1:Hp + 1, PAD_L:PAD_L + Wp, :] = (
        h1.reshape(Hp, Wp, Cmid).astype(mm_dtype))
    h2 = conv3x3(pad2, w2_ref, Cmid)                           # (Hp*Wp, Cout) f32

    # Shift + ReLU with (1, Cout) broadcast BEFORE the transpose, then one
    # lane-dense (Cout, Hp*Wp) store.
    out = jnp.maximum(h2 + b2_ref[...], 0.0)
    out_ref[...] = jnp.transpose(out).astype(out_ref.dtype)


@partial(jax.jit, static_argnames=("matmul_dtype",))
def down_forward(x_nchw, params, matmul_dtype=jnp.bfloat16):
    (w1_oihw, g1, be1, m1, v1, w2_oihw, g2, be2, m2, v2) = params
    N, Cin, H, W = x_nchw.shape
    # TODO(synk): odd H/W (MaxPool2d floors) not handled; require even sizes.
    assert H % 2 == 0 and W % 2 == 0
    Cmid = w1_oihw.shape[0]
    Cout = w2_oihw.shape[0]
    Hp, Wp = H // 2, W // 2

    # One layout pass: NCHW -> NHWC; the pool-friendly 5D view is a free
    # reshape (H -> (Hp,2), (W,C) -> (Wp, 2*C)).
    x = jnp.transpose(x_nchw, (0, 2, 3, 1)).astype(jnp.float32)
    x_r = x.reshape(N, Hp, 2, Wp, 2 * Cin)

    # Fold eval-mode BatchNorm: scale into the im2col weights (done once in
    # XLA, in f32, then cast to the matmul dtype), shift passed to the kernel.
    inv1 = g1 / jnp.sqrt(v1 + EPS)
    inv2 = g2 / jnp.sqrt(v2 + EPS)

    w1_mat = jnp.transpose(w1_oihw, (2, 3, 1, 0)).reshape(9 * Cin, Cmid)
    w1_mat = (w1_mat.astype(jnp.float32) * inv1[None, :]).astype(matmul_dtype)
    w2_mat = jnp.transpose(w2_oihw, (2, 3, 1, 0)).reshape(9 * Cmid, Cout)
    w2_mat = (w2_mat.astype(jnp.float32) * inv2[None, :]).astype(matmul_dtype)

    b1 = (be1 - m1 * inv1).reshape(1, Cmid).astype(jnp.float32)
    b2 = (be2 - m2 * inv2).reshape(1, Cout).astype(jnp.float32)

    wpad = Wp + 2 * PAD_L
    out_flat = pl.pallas_call(
        _down_kernel,
        out_shape=jax.ShapeDtypeStruct((N, Cout, Hp * Wp), jnp.float32),
        grid=(N,),
        in_specs=[
            pl.BlockSpec((None, Hp, 2, Wp, 2 * Cin),
                         lambda b: (b, 0, 0, 0, 0)),
            pl.BlockSpec((9 * Cin, Cmid), lambda b: (0, 0)),
            pl.BlockSpec((1, Cmid), lambda b: (0, 0)),
            pl.BlockSpec((9 * Cmid, Cout), lambda b: (0, 0)),
            pl.BlockSpec((1, Cout), lambda b: (0, 0)),
        ],
        out_specs=pl.BlockSpec((None, Cout, Hp * Wp), lambda b: (b, 0, 0)),
        scratch_shapes=[pltpu.VMEM((Hp + 2, wpad, Cin), matmul_dtype),
                        pltpu.VMEM((Hp + 2, wpad, Cmid), matmul_dtype)],
        compiler_params=pltpu.CompilerParams(
            dimension_semantics=("parallel",),
            # Safe on all chips; re-size together with H-strips for v7x.
            vmem_limit_bytes=48 * 1024 * 1024),
    )(x_r, w1_mat, b1, w2_mat, b2)

    # NCHW output via a free reshape (no transpose pass).
    return out_flat.reshape(N, Cout, Hp, Wp)


def down_reference(x_nchw, params):
    """Pure-JAX reference (same eval-mode BN semantics), all f32."""
    (w1, g1, be1, m1, v1, w2, g2, be2, m2, v2) = params
    xp = jax.lax.reduce_window(x_nchw, -jnp.inf, jax.lax.max,
                               (1, 1, 2, 2), (1, 1, 2, 2), 'VALID')

    def conv(x, w):
        return jax.lax.conv_general_dilated(
            x, w, window_strides=(1, 1), padding=((1, 1), (1, 1)),
            dimension_numbers=('NCHW', 'OIHW', 'NCHW'))

    def bn(x, g, b, m, v):
        inv = g / jnp.sqrt(v + EPS)
        return x * inv[None, :, None, None] + (b - m * inv)[None, :, None, None]

    h = jax.nn.relu(bn(conv(xp, w1), g1, be1, m1, v1))
    return jax.nn.relu(bn(conv(h, w2), g2, be2, m2, v2))


if __name__ == "__main__":
    key = jax.random.PRNGKey(0)
    N, Cin, H, W = 2, 4, 16, 16
    Cout = 8
    Cmid = Cout  # Down() uses mid_channels = out_channels

    ks = jax.random.split(key, 11)
    w1 = jax.random.normal(ks[0], (Cmid, Cin, 3, 3), jnp.float32) * 0.2
    g1 = 1.0 + 0.1 * jax.random.normal(ks[1], (Cmid,), jnp.float32)
    be1 = 0.1 * jax.random.normal(ks[2], (Cmid,), jnp.float32)
    m1 = 0.1 * jax.random.normal(ks[3], (Cmid,), jnp.float32)
    v1 = jax.random.uniform(ks[4], (Cmid,), jnp.float32, minval=0.5, maxval=1.5)
    w2 = jax.random.normal(ks[5], (Cout, Cmid, 3, 3), jnp.float32) * 0.2
    g2 = 1.0 + 0.1 * jax.random.normal(ks[6], (Cout,), jnp.float32)
    be2 = 0.1 * jax.random.normal(ks[7], (Cout,), jnp.float32)
    m2 = 0.1 * jax.random.normal(ks[8], (Cout,), jnp.float32)
    v2 = jax.random.uniform(ks[9], (Cout,), jnp.float32, minval=0.5, maxval=1.5)
    x = jax.random.normal(ks[10], (N, Cin, H, W), jnp.float32)

    params = (w1, g1, be1, m1, v1, w2, g2, be2, m2, v2)

    ref = jax.block_until_ready(down_reference(x, params))

    # Exact-parity path: f32 MXU operands.
    out_f32 = jax.block_until_ready(
        down_forward(x, params, matmul_dtype=jnp.float32))
    assert out_f32.shape == (N, Cout, H // 2, W // 2), out_f32.shape
    assert jnp.allclose(out_f32, ref, atol=1e-4, rtol=1e-4), float(
        jnp.max(jnp.abs(out_f32 - ref)))

    # Production path: bf16 MXU operands, f32 accumulation (looser tolerance).
    out_bf16 = jax.block_until_ready(
        down_forward(x, params, matmul_dtype=jnp.bfloat16))
    assert out_bf16.shape == (N, Cout, H // 2, W // 2), out_bf16.shape
    assert jnp.allclose(out_bf16, ref, atol=1e-1, rtol=1e-1), float(
        jnp.max(jnp.abs(out_bf16 - ref)))

    print("KERNEL_OK")
</pallas_src>

<mosaic_0001>
module attributes {stable_mosaic.version = 11 : i64} {
  func.func @_down_kernel(%arg0: i32, %arg1: memref<1x8x2x8x8xf32, #tpu.memory_space<vmem>>, %arg2: memref<36x8xf32, #tpu.memory_space<vmem>>, %arg3: memref<1x8xf32, #tpu.memory_space<vmem>>, %arg4: memref<72x8xf32, #tpu.memory_space<vmem>>, %arg5: memref<1x8xf32, #tpu.memory_space<vmem>>, %arg6: memref<1x8x64xf32, #tpu.memory_space<vmem>>, %arg7: memref<10x24x4xf32, #tpu.memory_space<vmem>>, %arg8: memref<10x24x8xf32, #tpu.memory_space<vmem>>) attributes {dimension_semantics = [#tpu.dimension_semantics<parallel>], iteration_bounds = array<i64: 2>, scalar_prefetch = 0 : i64, scratch_operands = 2 : i64, tpu.core_type = #tpu.core_type<tc>, window_params = [{transform_indices = @transform_0, window_bounds = array<i64: 1, 8, 2, 8, 8>}, {pipeline_mode = #tpu.pipeline_mode<synchronous>, transform_indices = @transform_1, window_bounds = array<i64: 36, 8>}, {pipeline_mode = #tpu.pipeline_mode<synchronous>, transform_indices = @transform_2, window_bounds = array<i64: 1, 8>}, {pipeline_mode = #tpu.pipeline_mode<synchronous>, transform_indices = @transform_3, window_bounds = array<i64: 72, 8>}, {pipeline_mode = #tpu.pipeline_mode<synchronous>, transform_indices = @transform_4, window_bounds = array<i64: 1, 8>}, {transform_indices = @transform_5, window_bounds = array<i64: 1, 8, 64>}]} {
    %c0 = arith.constant 0 : index
    %c0_0 = arith.constant 0 : index
    %c0_1 = arith.constant 0 : index
    %c0_2 = arith.constant 0 : index
    %c0_3 = arith.constant 0 : index
    %0 = vector.load %arg1[%c0, %c0_0, %c0_1, %c0_2, %c0_3] : memref<1x8x2x8x8xf32, #tpu.memory_space<vmem>>, vector<1x8x2x8x8xf32>
    %1 = vector.shape_cast %0 : vector<1x8x2x8x8xf32> to vector<8x2x8x8xf32>
    %2 = vector.extract_strided_slice %1 {offsets = [0, 0, 0, 0], sizes = [8, 1, 8, 8], strides = [1, 1, 1, 1]} : vector<8x2x8x8xf32> to vector<8x1x8x8xf32>
    %3 = vector.shape_cast %2 : vector<8x1x8x8xf32> to vector<8x8x8xf32>
    %4 = vector.extract_strided_slice %1 {offsets = [0, 1, 0, 0], sizes = [8, 1, 8, 8], strides = [1, 1, 1, 1]} : vector<8x2x8x8xf32> to vector<8x1x8x8xf32>
    %5 = vector.shape_cast %4 : vector<8x1x8x8xf32> to vector<8x8x8xf32>
    %6 = arith.maximumf %3, %5 : vector<8x8x8xf32>
    %7 = vector.extract_strided_slice %6 {offsets = [0, 0, 0], sizes = [8, 8, 4], strides = [1, 1, 1]} : vector<8x8x8xf32> to vector<8x8x4xf32>
    %8 = vector.extract_strided_slice %6 {offsets = [0, 0, 4], sizes = [8, 8, 4], strides = [1, 1, 1]} : vector<8x8x8xf32> to vector<8x8x4xf32>
    %9 = arith.maximumf %7, %8 : vector<8x8x4xf32>
    %cst = arith.constant 0.000000e+00 : f32
    %10 = vector.broadcast %cst : f32 to vector<10x8x4xf32>
    %c0_4 = arith.constant 0 : index
    %c0_5 = arith.constant 0 : index
    %c0_6 = arith.constant 0 : index
    %11 = vector.load %arg7[%c0_4, %c0_5, %c0_6] : memref<10x24x4xf32, #tpu.memory_space<vmem>>, vector<10x8x4xf32>
    tpu.vector_store %arg7[%c0_4, %c0_5, %c0_6], %10 {strides = array<i32>} : memref<10x24x4xf32, #tpu.memory_space<vmem>>, vector<10x8x4xf32>,
    %c0_7 = arith.constant 0 : index
    %c16 = arith.constant 16 : index
    %c0_8 = arith.constant 0 : index
    %12 = vector.load %arg7[%c0_7, %c16, %c0_8] : memref<10x24x4xf32, #tpu.memory_space<vmem>>, vector<10x8x4xf32>
    tpu.vector_store %arg7[%c0_7, %c16, %c0_8], %10 {strides = array<i32>} : memref<10x24x4xf32, #tpu.memory_space<vmem>>, vector<10x8x4xf32>,
    %cst_9 = arith.constant 0.000000e+00 : f32
    %13 = vector.broadcast %cst_9 : f32 to vector<1x8x4xf32>
    %c0_10 = arith.constant 0 : index
    %c8 = arith.constant 8 : index
    %c0_11 = arith.constant 0 : index
    %14 = vector.load %arg7[%c0_10, %c8, %c0_11] : memref<10x24x4xf32, #tpu.memory_space<vmem>>, vector<1x8x4xf32>
    tpu.vector_store %arg7[%c0_10, %c8, %c0_11], %13 {strides = array<i32>} : memref<10x24x4xf32, #tpu.memory_space<vmem>>, vector<1x8x4xf32>,
    %c9 = arith.constant 9 : index
    %c8_12 = arith.constant 8 : index
    %c0_13 = arith.constant 0 : index
    %15 = vector.load %arg7[%c9, %c8_12, %c0_13] : memref<10x24x4xf32, #tpu.memory_space<vmem>>, vector<1x8x4xf32>
    tpu.vector_store %arg7[%c9, %c8_12, %c0_13], %13 {strides = array<i32>} : memref<10x24x4xf32, #tpu.memory_space<vmem>>, vector<1x8x4xf32>,
    %c1 = arith.constant 1 : index
    %c8_14 = arith.constant 8 : index
    %c0_15 = arith.constant 0 : index
    %16 = vector.load %arg7[%c1, %c8_14, %c0_15] : memref<10x24x4xf32, #tpu.memory_space<vmem>>, vector<8x8x4xf32>
    tpu.vector_store %arg7[%c1, %c8_14, %c0_15], %9 {strides = array<i32>} : memref<10x24x4xf32, #tpu.memory_space<vmem>>, vector<8x8x4xf32>,
    %cst_16 = arith.constant 0.000000e+00 : f32
    %17 = vector.broadcast %cst_16 : f32 to vector<64x8xf32>
    %c0_17 = arith.constant 0 : index
    %c7 = arith.constant 7 : index
    %c0_18 = arith.constant 0 : index
    %18 = vector.load %arg7[%c0_17, %c7, %c0_18] : memref<10x24x4xf32, #tpu.memory_space<vmem>>, vector<8x8x4xf32>
    %c0_19 = arith.constant 0 : index
    %c8_20 = arith.constant 8 : index
    %c0_21 = arith.constant 0 : index
    %19 = vector.load %arg7[%c0_19, %c8_20, %c0_21] : memref<10x24x4xf32, #tpu.memory_space<vmem>>, vector<8x8x4xf32>
    %c0_22 = arith.constant 0 : index
    %c9_23 = arith.constant 9 : index
    %c0_24 = arith.constant 0 : index
    %20 = vector.load %arg7[%c0_22, %c9_23, %c0_24] : memref<10x24x4xf32, #tpu.memory_space<vmem>>, vector<8x8x4xf32>
    %21 = tpu.concatenate %18, %19, %20 in 2 : vector<8x8x4xf32>, vector<8x8x4xf32>, vector<8x8x4xf32> -> vector<8x8x12xf32>
    %22 = vector.shape_cast %21 : vector<8x8x12xf32> to vector<64x12xf32>
    %c0_25 = arith.constant 0 : index
    %c0_26 = arith.constant 0 : index
    %23 = vector.load %arg2[%c0_25, %c0_26] : memref<36x8xf32, #tpu.memory_space<vmem>>, vector<12x8xf32>
    %cst_27 = arith.constant dense<0.000000e+00> : vector<64x8xf32>
    %24 = tpu.matmul %22, %23, %cst_27 {dimension_numbers = #tpu.dot_dimension_numbers<[1], [0], [0], [1], [0, 0, 1, 1], [], []>} : vector<64x12xf32>, vector<12x8xf32>, vector<64x8xf32> -> vector<64x8xf32>
    %25 = arith.addf %17, %24 : vector<64x8xf32>
    %c1_28 = arith.constant 1 : index
    %c7_29 = arith.constant 7 : index
    %c0_30 = arith.constant 0 : index
    %26 = vector.load %arg7[%c1_28, %c7_29, %c0_30] : memref<10x24x4xf32, #tpu.memory_space<vmem>>, vector<8x8x4xf32>
    %c1_31 = arith.constant 1 : index
    %c8_32 = arith.constant 8 : index
    %c0_33 = arith.constant 0 : index
    %27 = vector.load %arg7[%c1_31, %c8_32, %c0_33] : memref<10x24x4xf32, #tpu.memory_space<vmem>>, vector<8x8x4xf32>
    %c1_34 = arith.constant 1 : index
    %c9_35 = arith.constant 9 : index
    %c0_36 = arith.constant 0 : index
    %28 = vector.load %arg7[%c1_34, %c9_35, %c0_36] : memref<10x24x4xf32, #tpu.memory_space<vmem>>, vector<8x8x4xf32>
    %29 = tpu.concatenate %26, %27, %28 in 2 : vector<8x8x4xf32>, vector<8x8x4xf32>, vector<8x8x4xf32> -> vector<8x8x12xf32>
    %30 = vector.shape_cast %29 : vector<8x8x12xf32> to vector<64x12xf32>
    %c12 = arith.constant 12 : index
    %c0_37 = arith.constant 0 : index
    %31 = vector.load %arg2[%c12, %c0_37] : memref<36x8xf32, #tpu.memory_space<vmem>>, vector<12x8xf32>
    %cst_38 = arith.constant dense<0.000000e+00> : vector<64x8xf32>
    %32 = tpu.matmul %30, %31, %cst_38 {dimension_numbers = #tpu.dot_dimension_numbers<[1], [0], [0], [1], [0, 0, 1, 1], [], []>} : vector<64x12xf32>, vector<12x8xf32>, vector<64x8xf32> -> vector<64x8xf32>
    %33 = arith.addf %25, %32 : vector<64x8xf32>
    %c2 = arith.constant 2 : index
    %c7_39 = arith.constant 7 : index
    %c0_40 = arith.constant 0 : index
    %34 = vector.load %arg7[%c2, %c7_39, %c0_40] : memref<10x24x4xf32, #tpu.memory_space<vmem>>, vector<8x8x4xf32>
    %c2_41 = arith.constant 2 : index
    %c8_42 = arith.constant 8 : index
    %c0_43 = arith.constant 0 : index
    %35 = vector.load %arg7[%c2_41, %c8_42, %c0_43] : memref<10x24x4xf32, #tpu.memory_space<vmem>>, vector<8x8x4xf32>
    %c2_44 = arith.constant 2 : index
    %c9_45 = arith.constant 9 : index
    %c0_46 = arith.constant 0 : index
    %36 = vector.load %arg7[%c2_44, %c9_45, %c0_46] : memref<10x24x4xf32, #tpu.memory_space<vmem>>, vector<8x8x4xf32>
    %37 = tpu.concatenate %34, %35, %36 in 2 : vector<8x8x4xf32>, vector<8x8x4xf32>, vector<8x8x4xf32> -> vector<8x8x12xf32>
    %38 = vector.shape_cast %37 : vector<8x8x12xf32> to vector<64x12xf32>
    %c24 = arith.constant 24 : index
    %c0_47 = arith.constant 0 : index
    %39 = vector.load %arg2[%c24, %c0_47] : memref<36x8xf32, #tpu.memory_space<vmem>>, vector<12x8xf32>
    %cst_48 = arith.constant dense<0.000000e+00> : vector<64x8xf32>
    %40 = tpu.matmul %38, %39, %cst_48 {dimension_numbers = #tpu.dot_dimension_numbers<[1], [0], [0], [1], [0, 0, 1, 1], [], []>} : vector<64x12xf32>, vector<12x8xf32>, vector<64x8xf32> -> vector<64x8xf32>
    %41 = arith.addf %33, %40 : vector<64x8xf32>
    %c0_49 = arith.constant 0 : index
    %c0_50 = arith.constant 0 : index
    %42 = vector.load %arg3[%c0_49, %c0_50] : memref<1x8xf32, #tpu.memory_space<vmem>>, vector<1x8xf32>
    %43 = vector.broadcast %42 : vector<1x8xf32> to vector<64x8xf32>
    %44 = arith.addf %41, %43 : vector<64x8xf32>
    %cst_51 = arith.constant 0.000000e+00 : f32
    %45 = vector.broadcast %cst_51 : f32 to vector<64x8xf32>
    %46 = arith.maximumf %44, %45 : vector<64x8xf32>
    %cst_52 = arith.constant 0.000000e+00 : f32
    %47 = vector.broadcast %cst_52 : f32 to vector<10x8x8xf32>
    %c0_53 = arith.constant 0 : index
    %c0_54 = arith.constant 0 : index
    %c0_55 = arith.constant 0 : index
    %48 = vector.load %arg8[%c0_53, %c0_54, %c0_55] : memref<10x24x8xf32, #tpu.memory_space<vmem>>, vector<10x8x8xf32>
    tpu.vector_store %arg8[%c0_53, %c0_54, %c0_55], %47 {strides = array<i32>} : memref<10x24x8xf32, #tpu.memory_space<vmem>>, vector<10x8x8xf32>,
    %c0_56 = arith.constant 0 : index
    %c16_57 = arith.constant 16 : index
    %c0_58 = arith.constant 0 : index
    %49 = vector.load %arg8[%c0_56, %c16_57, %c0_58] : memref<10x24x8xf32, #tpu.memory_space<vmem>>, vector<10x8x8xf32>
    tpu.vector_store %arg8[%c0_56, %c16_57, %c0_58], %47 {strides = array<i32>} : memref<10x24x8xf32, #tpu.memory_space<vmem>>, vector<10x8x8xf32>,
    %cst_59 = arith.constant 0.000000e+00 : f32
    %50 = vector.broadcast %cst_59 : f32 to vector<1x8x8xf32>
    %c0_60 = arith.constant 0 : index
    %c8_61 = arith.constant 8 : index
    %c0_62 = arith.constant 0 : index
    %51 = vector.load %arg8[%c0_60, %c8_61, %c0_62] : memref<10x24x8xf32, #tpu.memory_space<vmem>>, vector<1x8x8xf32>
    tpu.vector_store %arg8[%c0_60, %c8_61, %c0_62], %50 {strides = array<i32>} : memref<10x24x8xf32, #tpu.memory_space<vmem>>, vector<1x8x8xf32>,
    %c9_63 = arith.constant 9 : index
    %c8_64 = arith.constant 8 : index
    %c0_65 = arith.constant 0 : index
    %52 = vector.load %arg8[%c9_63, %c8_64, %c0_65] : memref<10x24x8xf32, #tpu.memory_space<vmem>>, vector<1x8x8xf32>
    tpu.vector_store %arg8[%c9_63, %c8_64, %c0_65], %50 {strides = array<i32>} : memref<10x24x8xf32, #tpu.memory_space<vmem>>, vector<1x8x8xf32>,
    %53 = vector.shape_cast %46 : vector<64x8xf32> to vector<8x8x8xf32>
    %c1_66 = arith.constant 1 : index
    %c8_67 = arith.constant 8 : index
    %c0_68 = arith.constant 0 : index
    %54 = vector.load %arg8[%c1_66, %c8_67, %c0_68] : memref<10x24x8xf32, #tpu.memory_space<vmem>>, vector<8x8x8xf32>
    tpu.vector_store %arg8[%c1_66, %c8_67, %c0_68], %53 {strides = array<i32>} : memref<10x24x8xf32, #tpu.memory_space<vmem>>, vector<8x8x8xf32>,
    %cst_69 = arith.constant 0.000000e+00 : f32
    %55 = vector.broadcast %cst_69 : f32 to vector<64x8xf32>
    %c0_70 = arith.constant 0 : index
    %c7_71 = arith.constant 7 : index
    %c0_72 = arith.constant 0 : index
    %56 = vector.load %arg8[%c0_70, %c7_71, %c0_72] : memref<10x24x8xf32, #tpu.memory_space<vmem>>, vector<8x8x8xf32>
    %c0_73 = arith.constant 0 : index
    %c8_74 = arith.constant 8 : index
    %c0_75 = arith.constant 0 : index
    %57 = vector.load %arg8[%c0_73, %c8_74, %c0_75] : memref<10x24x8xf32, #tpu.memory_space<vmem>>, vector<8x8x8xf32>
    %c0_76 = arith.constant 0 : index
    %c9_77 = arith.constant 9 : index
    %c0_78 = arith.constant 0 : index
    %58 = vector.load %arg8[%c0_76, %c9_77, %c0_78] : memref<10x24x8xf32, #tpu.memory_space<vmem>>, vector<8x8x8xf32>
    %59 = tpu.concatenate %56, %57, %58 in 2 : vector<8x8x8xf32>, vector<8x8x8xf32>, vector<8x8x8xf32> -> vector<8x8x24xf32>
    %60 = vector.shape_cast %59 : vector<8x8x24xf32> to vector<64x24xf32>
    %c0_79 = arith.constant 0 : index
    %c0_80 = arith.constant 0 : index
    %61 = vector.load %arg4[%c0_79, %c0_80] : memref<72x8xf32, #tpu.memory_space<vmem>>, vector<24x8xf32>
    %cst_81 = arith.constant dense<0.000000e+00> : vector<64x8xf32>
    %62 = tpu.matmul %60, %61, %cst_81 {dimension_numbers = #tpu.dot_dimension_numbers<[1], [0], [0], [1], [0, 0, 1, 1], [], []>} : vector<64x24xf32>, vector<24x8xf32>, vector<64x8xf32> -> vector<64x8xf32>
    %63 = arith.addf %55, %62 : vector<64x8xf32>
    %c1_82 = arith.constant 1 : index
    %c7_83 = arith.constant 7 : index
    %c0_84 = arith.constant 0 : index
    %64 = vector.load %arg8[%c1_82, %c7_83, %c0_84] : memref<10x24x8xf32, #tpu.memory_space<vmem>>, vector<8x8x8xf32>
    %c1_85 = arith.constant 1 : index
    %c8_86 = arith.constant 8 : index
    %c0_87 = arith.constant 0 : index
    %65 = vector.load %arg8[%c1_85, %c8_86, %c0_87] : memref<10x24x8xf32, #tpu.memory_space<vmem>>, vector<8x8x8xf32>
    %c1_88 = arith.constant 1 : index
    %c9_89 = arith.constant 9 : index
    %c0_90 = arith.constant 0 : index
    %66 = vector.load %arg8[%c1_88, %c9_89, %c0_90] : memref<10x24x8xf32, #tpu.memory_space<vmem>>, vector<8x8x8xf32>
    %67 = tpu.concatenate %64, %65, %66 in 2 : vector<8x8x8xf32>, vector<8x8x8xf32>, vector<8x8x8xf32> -> vector<8x8x24xf32>
    %68 = vector.shape_cast %67 : vector<8x8x24xf32> to vector<64x24xf32>
    %c24_91 = arith.constant 24 : index
    %c0_92 = arith.constant 0 : index
    %69 = vector.load %arg4[%c24_91, %c0_92] : memref<72x8xf32, #tpu.memory_space<vmem>>, vector<24x8xf32>
    %cst_93 = arith.constant dense<0.000000e+00> : vector<64x8xf32>
    %70 = tpu.matmul %68, %69, %cst_93 {dimension_numbers = #tpu.dot_dimension_numbers<[1], [0], [0], [1], [0, 0, 1, 1], [], []>} : vector<64x24xf32>, vector<24x8xf32>, vector<64x8xf32> -> vector<64x8xf32>
    %71 = arith.addf %63, %70 : vector<64x8xf32>
    %c2_94 = arith.constant 2 : index
    %c7_95 = arith.constant 7 : index
    %c0_96 = arith.constant 0 : index
    %72 = vector.load %arg8[%c2_94, %c7_95, %c0_96] : memref<10x24x8xf32, #tpu.memory_space<vmem>>, vector<8x8x8xf32>
    %c2_97 = arith.constant 2 : index
    %c8_98 = arith.constant 8 : index
    %c0_99 = arith.constant 0 : index
    %73 = vector.load %arg8[%c2_97, %c8_98, %c0_99] : memref<10x24x8xf32, #tpu.memory_space<vmem>>, vector<8x8x8xf32>
    %c2_100 = arith.constant 2 : index
    %c9_101 = arith.constant 9 : index
    %c0_102 = arith.constant 0 : index
    %74 = vector.load %arg8[%c2_100, %c9_101, %c0_102] : memref<10x24x8xf32, #tpu.memory_space<vmem>>, vector<8x8x8xf32>
    %75 = tpu.concatenate %72, %73, %74 in 2 : vector<8x8x8xf32>, vector<8x8x8xf32>, vector<8x8x8xf32> -> vector<8x8x24xf32>
    %76 = vector.shape_cast %75 : vector<8x8x24xf32> to vector<64x24xf32>
    %c48 = arith.constant 48 : index
    %c0_103 = arith.constant 0 : index
    %77 = vector.load %arg4[%c48, %c0_103] : memref<72x8xf32, #tpu.memory_space<vmem>>, vector<24x8xf32>
    %cst_104 = arith.constant dense<0.000000e+00> : vector<64x8xf32>
    %78 = tpu.matmul %76, %77, %cst_104 {dimension_numbers = #tpu.dot_dimension_numbers<[1], [0], [0], [1], [0, 0, 1, 1], [], []>} : vector<64x24xf32>, vector<24x8xf32>, vector<64x8xf32> -> vector<64x8xf32>
    %79 = arith.addf %71, %78 : vector<64x8xf32>
    %c0_105 = arith.constant 0 : index
    %c0_106 = arith.constant 0 : index
    %80 = vector.load %arg5[%c0_105, %c0_106] : memref<1x8xf32, #tpu.memory_space<vmem>>, vector<1x8xf32>
    %81 = vector.broadcast %80 : vector<1x8xf32> to vector<64x8xf32>
    %82 = arith.addf %79, %81 : vector<64x8xf32>
    %cst_107 = arith.constant 0.000000e+00 : f32
    %83 = vector.broadcast %cst_107 : f32 to vector<64x8xf32>
    %84 = arith.maximumf %82, %83 : vector<64x8xf32>
    %85 = tpu.transpose %84, [1, 0] : vector<64x8xf32> -> vector<8x64xf32>
    %c0_108 = arith.constant 0 : index
    %c0_109 = arith.constant 0 : index
    %c0_110 = arith.constant 0 : index
    %86 = vector.load %arg6[%c0_108, %c0_109, %c0_110] : memref<1x8x64xf32, #tpu.memory_space<vmem>>, vector<1x8x64xf32>
    %87 = vector.shape_cast %86 : vector<1x8x64xf32> to vector<8x64xf32>
    %88 = vector.shape_cast %85 : vector<8x64xf32> to vector<1x8x64xf32>
    tpu.vector_store %arg6[%c0_108, %c0_109, %c0_110], %88 {strides = array<i32>} : memref<1x8x64xf32, #tpu.memory_space<vmem>>, vector<1x8x64xf32>,
    return
  }
  func.func @transform_0(%arg0: i32) -> (i32, i32, i32, i32, i32) {
    %c0_i32 = arith.constant 0 : i32
    %c0_i32_0 = arith.constant 0 : i32
    %c0_i32_1 = arith.constant 0 : i32
    %c0_i32_2 = arith.constant 0 : i32
    %c0_i32_3 = arith.constant 0 : i32
    return %arg0, %c0_i32, %c0_i32_0, %c0_i32_1, %c0_i32_2 : i32, i32, i32, i32, i32
  }
  func.func @transform_1(%arg0: i32) -> (i32, i32) {
    %c0_i32 = arith.constant 0 : i32
    %c0_i32_0 = arith.constant 0 : i32
    %c0_i32_1 = arith.constant 0 : i32
    return %c0_i32, %c0_i32_0 : i32, i32
  }
  func.func @transform_2(%arg0: i32) -> (i32, i32) {
    %c0_i32 = arith.constant 0 : i32
    %c0_i32_0 = arith.constant 0 : i32
    %c0_i32_1 = arith.constant 0 : i32
    return %c0_i32, %c0_i32_0 : i32, i32
  }
  func.func @transform_3(%arg0: i32) -> (i32, i32) {
    %c0_i32 = arith.constant 0 : i32
    %c0_i32_0 = arith.constant 0 : i32
    %c0_i32_1 = arith.constant 0 : i32
    return %c0_i32, %c0_i32_0 : i32, i32
  }
  func.func @transform_4(%arg0: i32) -> (i32, i32) {
    %c0_i32 = arith.constant 0 : i32
    %c0_i32_0 = arith.constant 0 : i32
    %c0_i32_1 = arith.constant 0 : i32
    return %c0_i32, %c0_i32_0 : i32, i32
  }
  func.func @transform_5(%arg0: i32) -> (i32, i32, i32) {
    %c0_i32 = arith.constant 0 : i32
    %c0_i32_0 = arith.constant 0 : i32
    %c0_i32_1 = arith.constant 0 : i32
    return %arg0, %c0_i32, %c0_i32_0 : i32, i32, i32
  }
}

</mosaic_0001>

<llo_original>
// kernel: down_forward.1
$region0: #{down_forward.1}
  #allocation0 [shape = 'u32[]', space=smem, size = 0x4, offset = 0x4, fixed_abs, tag = 'smem constant byte address 0x4 - core index']
  #allocation1 [shape = 'u32[144,128]{1,0:T(1,128)}', space=vmem, size = 0x12000, scoped, tag = 'internal scratch']
  #allocation2 [shape = 'f32[10,24,4]{2,1,0:T(8,128)}', space=vmem, size = 0x1e000, scoped, tag = 'scratch operand']
  #allocation3 [shape = 'f32[10,24,8]{2,1,0:T(8,128)}', space=vmem, size = 0x1e000, scoped, tag = 'scratch operand']
  %s0 = inlined_call_operand.vmem [shape: f32[2,8,2,8,8], index: 0, kind: input, shape index: {}]
  %s1 = inlined_call_operand.vmem [shape: f32[36,8], index: 1, kind: input, shape index: {}]
  %s2 = inlined_call_operand.vmem [shape: f32[1,8], index: 2, kind: input, shape index: {}]
  %s3 = inlined_call_operand.vmem [shape: f32[72,8], index: 3, kind: input, shape index: {}]
  %s4 = inlined_call_operand.vmem [shape: f32[1,8], index: 4, kind: input, shape index: {}]
  %s5 = inlined_call_operand.vmem [shape: f32[2,8,64], index: 5, kind: output, shape index: {}]
  %s6 = sld [smem:[#allocation0]]
  $region53: #{down_forward.1} parent=0
    _
  %s8 = ssub.s32 1, %s6
  %s9 = scalar_select 0, %s8, %s6
  loop: start=0, step=1, limit=4
  $region2: #{down_forward.1} parent=0 // loop_pre_header
    _
  $region3: #{down_forward.1} parent=0 // loop_header
    %s11 = sphi 0, %s15
    %p12 = scmp.ge.s32.totalorder %s11, 4
    %s21 = sphi 0, %s23
    %s24 = sphi 0, %s21
    %s25 = sphi 0, %s24
    %s41 = sphi 0, %s25
    %s45 = sphi 0, %s45
    %s47 = sphi 0, %s45
    %s48 = sphi 0, %s47
    %s62 = sphi 0, %s48
    %s66 = sphi 0, %s66
    %s68 = sphi 0, %s66
    %s69 = sphi 0, %s68
    %s83 = sphi 0, %s69
    %s87 = sphi 0, %s87
    %s89 = sphi 0, %s87
    %s90 = sphi 0, %s89
    %s104 = sphi 0, %s90
    %s108 = sphi 0, %s108
    %s110 = sphi 0, %s108
    %s111 = sphi 0, %s110
    %s125 = sphi 0, %s111
    %s131 = sphi 0, %s133
    %s134 = sphi 0, %s131
    %s135 = sphi 0, %s134
    %s151 = sphi 0, %s135
  $region4: #{down_forward.1} parent=0 // loop_header_branch
    %14 = sbr.rel (%p12) target = $region8
  $region5: #{down_forward.1} parent=0 // loop_body
    %s16 = ssub.s32 %s11, 1
    %s17 = ssub.s32 %s11, 2
    %s18 = sadd.s32 %s11, 1
    %s19 = ssub.s32 %s11, %s18
    %p20 = scmp.eq.s32.totalorder %s19, 0
    %s22 = sadd.s32 %s21, 1
    %s23 = scalar_select %p20, %s21, %s22
    %p26 = pneg %p20
    %p27 = scmp.eq.s32.totalorder %s11, 1
    %p28 = por %p26, %p27
    %p29 = scmp.ne.s32.totalorder %s21, %s24
    %p30 = scmp.eq.s32.totalorder %s11, 0
    %p31 = por %p29, %p30
    %p32 = scmp.ne.s32.totalorder %s21, %s24
    %p33 = scmp.eq.s32.totalorder %s16, 1
    %p34 = por %p32, %p33
    %p35 = scmp.ne.s32.totalorder %s24, %s25
    %p36 = scmp.eq.s32.totalorder %s16, 0
    %p37 = por %p35, %p36
    %p38 = scmp.ne.s32.totalorder %s24, %s25
    %p39 = scmp.eq.s32.totalorder %s17, 1
    %p40 = por %p38, %p39
    %p42 = scmp.ne.s32.totalorder %s25, %s41
    %p43 = scmp.eq.s32.totalorder %s17, 0
    %p44 = por %p42, %p43
    %s46 = sadd.s32 %s45, 1
    %p49 = scmp.eq.s32.totalorder %s11, 1
    %p50 = scmp.ne.s32.totalorder %s45, %s47
    %p51 = scmp.eq.s32.totalorder %s11, 0
    %p52 = por %p50, %p51
    %p53 = scmp.ne.s32.totalorder %s45, %s47
    %p54 = scmp.eq.s32.totalorder %s16, 1
    %p55 = por %p53, %p54
    %p56 = scmp.ne.s32.totalorder %s47, %s48
    %p57 = scmp.eq.s32.totalorder %s16, 0
    %p58 = por %p56, %p57
    %p59 = scmp.ne.s32.totalorder %s47, %s48
    %p60 = scmp.eq.s32.totalorder %s17, 1
    %p61 = por %p59, %p60
    %p63 = scmp.ne.s32.totalorder %s48, %s62
    %p64 = scmp.eq.s32.totalorder %s17, 0
    %p65 = por %p63, %p64
    %s67 = sadd.s32 %s66, 1
    %p70 = scmp.eq.s32.totalorder %s11, 1
    %p71 = scmp.ne.s32.totalorder %s66, %s68
    %p72 = scmp.eq.s32.totalorder %s11, 0
    %p73 = por %p71, %p72
    %p74 = scmp.ne.s32.totalorder %s66, %s68
    %p75 = scmp.eq.s32.totalorder %s16, 1
    %p76 = por %p74, %p75
    %p77 = scmp.ne.s32.totalorder %s68, %s69
    %p78 = scmp.eq.s32.totalorder %s16, 0
    %p79 = por %p77, %p78
    %p80 = scmp.ne.s32.totalorder %s68, %s69
    %p81 = scmp.eq.s32.totalorder %s17, 1
    %p82 = por %p80, %p81
    %p84 = scmp.ne.s32.totalorder %s69, %s83
    %p85 = scmp.eq.s32.totalorder %s17, 0
    %p86 = por %p84, %p85
    %s88 = sadd.s32 %s87, 1
    %p91 = scmp.eq.s32.totalorder %s11, 1
    %p92 = scmp.ne.s32.totalorder %s87, %s89
    %p93 = scmp.eq.s32.totalorder %s11, 0
    %p94 = por %p92, %p93
    %p95 = scmp.ne.s32.totalorder %s87, %s89
    %p96 = scmp.eq.s32.totalorder %s16, 1
    %p97 = por %p95, %p96
    %p98 = scmp.ne.s32.totalorder %s89, %s90
    %p99 = scmp.eq.s32.totalorder %s16, 0
    %p100 = por %p98, %p99
    %p101 = scmp.ne.s32.totalorder %s89, %s90
    %p102 = scmp.eq.s32.totalorder %s17, 1
    %p103 = por %p101, %p102
    %p105 = scmp.ne.s32.totalorder %s90, %s104
    %p106 = scmp.eq.s32.totalorder %s17, 0
    %p107 = por %p105, %p106
    %s109 = sadd.s32 %s108, 1
    %p112 = scmp.eq.s32.totalorder %s11, 1
    %p113 = scmp.ne.s32.totalorder %s108, %s110
    %p114 = scmp.eq.s32.totalorder %s11, 0
    %p115 = por %p113, %p114
    %p116 = scmp.ne.s32.totalorder %s108, %s110
    %p117 = scmp.eq.s32.totalorder %s16, 1
    %p118 = por %p116, %p117
    %p119 = scmp.ne.s32.totalorder %s110, %s111
    %p120 = scmp.eq.s32.totalorder %s16, 0
    %p121 = por %p119, %p120
    %p122 = scmp.ne.s32.totalorder %s110, %s111
    %p123 = scmp.eq.s32.totalorder %s17, 1
    %p124 = por %p122, %p123
    %p126 = scmp.ne.s32.totalorder %s111, %s125
    %p127 = scmp.eq.s32.totalorder %s17, 0
    %p128 = por %p126, %p127
    %s129 = ssub.s32 %s11, %s18
    %p130 = scmp.eq.s32.totalorder %s129, 0
    %s132 = sadd.s32 %s131, 1
    %s133 = scalar_select %p130, %s131, %s132
    %p136 = pneg %p130
    %p137 = scmp.eq.s32.totalorder %s11, 1
    %p138 = por %p136, %p137
    %p139 = scmp.ne.s32.totalorder %s131, %s134
    %p140 = scmp.eq.s32.totalorder %s11, 0
    %p141 = por %p139, %p140
    %p142 = scmp.ne.s32.totalorder %s131, %s134
    %p143 = scmp.eq.s32.totalorder %s16, 1
    %p144 = por %p142, %p143
    %p145 = scmp.ne.s32.totalorder %s134, %s135
    %p146 = scmp.eq.s32.totalorder %s16, 0
    %p147 = por %p145, %p146
    %p148 = scmp.ne.s32.totalorder %s134, %s135
    %p149 = scmp.eq.s32.totalorder %s17, 1
    %p150 = por %p148, %p149
    %p152 = scmp.ne.s32.totalorder %s135, %s151
    %p153 = scmp.eq.s32.totalorder %s17, 0
    %p154 = por %p152, %p153
    %p155 = scmp.le.s32.totalorder 1, %s11
    %p156 = scmp.lt.s32.totalorder %s11, 3
    %p157 = pnand %p155, %p156
    %p158 = pneg %p157
    // Predicated region
    $region9: #{down_forward.1} parent=5 // pred_check
      _
    $region10: #{down_forward.1} parent=5 // pred_check_branch
      %160 = sbr.rel (%p157) target = $region12
    $region11: #{down_forward.1} parent=5 // pred_region
      %s161 = ssub.s32 %s11, 1
      // Predicated region
      $region13: #{down_forward.1} parent=11 // pred_check
        %p162 = pneg %p58
      $region14: #{down_forward.1} parent=11 // pred_check_branch
        %164 = sbr.rel (%p162) target = $region16
      $region15: #{down_forward.1} parent=11 // pred_region
        _
      $region16: #{down_forward.1} parent=11 // pred_fallthru
        _
      // Predicated region
      $region17: #{down_forward.1} parent=11 // pred_check
        %p165 = pneg %p79
      $region18: #{down_forward.1} parent=11 // pred_check_branch
        %167 = sbr.rel (%p165) target = $region20
      $region19: #{down_forward.1} parent=11 // pred_region
        _
      $region20: #{down_forward.1} parent=11 // pred_fallthru
        _
      // Predicated region
      $region21: #{down_forward.1} parent=11 // pred_check
        %p168 = pneg %p100
      $region22: #{down_forward.1} parent=11 // pred_check_branch
        %170 = sbr.rel (%p168) target = $region24
      $region23: #{down_forward.1} parent=11 // pred_region
        _
      $region24: #{down_forward.1} parent=11 // pred_fallthru
        _
      // Predicated region
      $region25: #{down_forward.1} parent=11 // pred_check
        %p171 = pneg %p121
      $region26: #{down_forward.1} parent=11 // pred_check_branch
        %173 = sbr.rel (%p171) target = $region28
      $region27: #{down_forward.1} parent=11 // pred_region
        _
      $region28: #{down_forward.1} parent=11 // pred_fallthru
        _
    $region12: #{down_forward.1} parent=5 // pred_fallthru
      _
    %p174 = scmp.lt.s32.totalorder %s11, 2
    // Predicated region
    $region29: #{down_forward.1} parent=5 // pred_check
      %p175 = pneg %p174
    $region30: #{down_forward.1} parent=5 // pred_check_branch
      %177 = sbr.rel (%p175) target = $region32
    $region31: #{down_forward.1} parent=5 // pred_region
      // Predicated region
      $region33: #{down_forward.1} parent=31 // pred_check
        %p178 = pneg %p31
      $region34: #{down_forward.1} parent=31 // pred_check_branch
        %180 = sbr.rel (%p178) target = $region36
      $region35: #{down_forward.1} parent=31 // pred_region
        %p181 = scmp.lt.s32.totalorder %s11, 1
        %s182 = scalar_select %p181, %s11, 1
        %s183 = smul.addr %s182, 16
        %s184 = smul.addr %s183, 8
        %s185 = scalar_lea.vmem %s0, %s184
      $region36: #{down_forward.1} parent=31 // pred_fallthru
        _
    $region32: #{down_forward.1} parent=5 // pred_fallthru
      _
    %p186 = scmp.le.s32.totalorder 1, %s11
    %p187 = scmp.lt.s32.totalorder %s11, 3
    %p188 = pnand %p186, %p187
    %p189 = pneg %p188
    // Predicated region
    $region37: #{down_forward.1} parent=5 // pred_check
      _
    $region38: #{down_forward.1} parent=5 // pred_check_branch
      %191 = sbr.rel (%p188) target = $region40
    $region39: #{down_forward.1} parent=5 // pred_region
      %s192 = ssub.s32 %s11, 1
      %p193 = scmp.lt.s32.totalorder %s16, 1
      %s194 = scalar_select %p193, %s16, 1
      %s195 = smul.addr %s194, 16
      %s196 = smul.addr %s195, 8
      %s197 = scalar_lea.vmem %s0, %s196
      %p198 = pneg %p37
      %p199 = pneg %p34
      %p200 = pneg %p58
      %p201 = pneg %p55
      %p202 = pneg %p79
      %p203 = pneg %p76
      %p204 = pneg %p100
      %p205 = pneg %p97
      %p206 = pneg %p121
      %p207 = pneg %p118
      %p208 = pneg %p147
      %p209 = pneg %p144
      %p210 = scmp.lt.s32.totalorder %s16, 1
      %s211 = scalar_select %p210, %s16, 1
      %s212 = smul.addr %s211, 8
      %s213 = scalar_lea.vmem %s5, %s212
      %p214 = scmp.lt.s32.totalorder %s16, 1
      %s215 = scalar_select %p214, %s16, 1
      %s216 = smul.addr %s215, 16
      %s217 = smul.addr %s216, 8
      %s218 = scalar_lea.vmem %s0, %s217
      %p219 = scmp.lt.s32.totalorder %s16, 1
      %s220 = scalar_select %p219, %s16, 1
      %s221 = smul.addr %s220, 8
      %s222 = scalar_lea.vmem %s5, %s221
      %v223 = vld [vmem:[%s218] sm:$0xff]
      %v224 = vld [vmem:[%s218 + $0x8] sm:$0xff]
      %v225 = vld [vmem:[%s218 + $0x10] sm:$0xff]
      %v226 = vld [vmem:[%s218 + $0x18] sm:$0xff]
      %v227 = vld [vmem:[%s218 + $0x20] sm:$0xff]
      %v228 = vld [vmem:[%s218 + $0x28] sm:$0xff]
      %v229 = vld [vmem:[%s218 + $0x30] sm:$0xff]
      %v230 = vld [vmem:[%s218 + $0x38] sm:$0xff]
      %v231 = vld [vmem:[%s218 + $0x40] sm:$0xff]
      %v232 = vld [vmem:[%s218 + $0x48] sm:$0xff]
      %v233 = vld [vmem:[%s218 + $0x50] sm:$0xff]
      %v234 = vld [vmem:[%s218 + $0x58] sm:$0xff]
      %v235 = vld [vmem:[%s218 + $0x60] sm:$0xff]
      %v236 = vld [vmem:[%s218 + $0x68] sm:$0xff]
      %v237 = vld [vmem:[%s218 + $0x70] sm:$0xff]
      %v238 = vld [vmem:[%s218 + $0x78] sm:$0xff]
      %v239 = vmax.f32 %v223, %v224
      %v240 = vmax.f32 %v225, %v226
      %v241 = vmax.f32 %v227, %v228
      %v242 = vmax.f32 %v229, %v230
      %v243 = vmax.f32 %v231, %v232
      %v244 = vmax.f32 %v233, %v234
      %v245 = vmax.f32 %v235, %v236
      %v246 = vmax.f32 %v237, %v238
      %255 = vrot.lane.b32.xlu0 %v239, 124
      %v256 = vpop.permute.xlu0 %255
      %257 = vrot.lane.b32.xlu0 %v240, 124
      %v258 = vpop.permute.xlu0 %257
      %259 = vrot.lane.b32.xlu0 %v241, 124
      %v260 = vpop.permute.xlu0 %259
      %261 = vrot.lane.b32.xlu0 %v242, 124
      %v262 = vpop.permute.xlu0 %261
      %263 = vrot.lane.b32.xlu0 %v243, 124
      %v264 = vpop.permute.xlu0 %263
      %265 = vrot.lane.b32.xlu0 %v244, 124
      %v266 = vpop.permute.xlu0 %265
      %267 = vrot.lane.b32.xlu0 %v245, 124
      %v268 = vpop.permute.xlu0 %267
      %269 = vrot.lane.b32.xlu0 %v246, 124
      %v270 = vpop.permute.xlu0 %269
      %v279 = vmax.f32 %v239, %v256
      %v280 = vmax.f32 %v240, %v258
      %v281 = vmax.f32 %v241, %v260
      %v282 = vmax.f32 %v242, %v262
      %v283 = vmax.f32 %v243, %v264
      %v284 = vmax.f32 %v244, %v266
      %v285 = vmax.f32 %v245, %v268
      %v286 = vmax.f32 %v246, %v270
      %vm287 = vcmask 31744
      %288 = vst.msk [vmem:[#allocation2] sm:$0xff] %vm287, 0.0
      %289 = vst.msk [vmem:[#allocation2 + $0x18] sm:$0xff] %vm287, 0.0
      %290 = vst.msk [vmem:[#allocation2 + $0x30] sm:$0xff] %vm287, 0.0
      %291 = vst.msk [vmem:[#allocation2 + $0x48] sm:$0xff] %vm287, 0.0
      %292 = vst.msk [vmem:[#allocation2 + $0x60] sm:$0xff] %vm287, 0.0
      %293 = vst.msk [vmem:[#allocation2 + $0x78] sm:$0xff] %vm287, 0.0
      %294 = vst.msk [vmem:[#allocation2 + $0x90] sm:$0xff] %vm287, 0.0
      %295 = vst.msk [vmem:[#allocation2 + $0xa8] sm:$0xff] %vm287, 0.0
      %296 = vst.msk [vmem:[#allocation2 + $0xc0] sm:$0xff] %vm287, 0.0
      %297 = vst.msk [vmem:[#allocation2 + $0xd8] sm:$0xff] %vm287, 0.0
      %298 = vst.msk [vmem:[#allocation2 + $0x10] sm:$0xff] %vm287, 0.0
      %299 = vst.msk [vmem:[#allocation2 + $0x28] sm:$0xff] %vm287, 0.0
      %300 = vst.msk [vmem:[#allocation2 + $0x40] sm:$0xff] %vm287, 0.0
      %301 = vst.msk [vmem:[#allocation2 + $0x58] sm:$0xff] %vm287, 0.0
      %302 = vst.msk [vmem:[#allocation2 + $0x70] sm:$0xff] %vm287, 0.0
      %303 = vst.msk [vmem:[#allocation2 + $0x88] sm:$0xff] %vm287, 0.0
      %304 = vst.msk [vmem:[#allocation2 + $0xa0] sm:$0xff] %vm287, 0.0
      %305 = vst.msk [vmem:[#allocation2 + $0xb8] sm:$0xff] %vm287, 0.0
      %306 = vst.msk [vmem:[#allocation2 + $0xd0] sm:$0xff] %vm287, 0.0
      %307 = vst.msk [vmem:[#allocation2 + $0xe8] sm:$0xff] %vm287, 0.0
      %308 = vst.msk [vmem:[#allocation2 + $0x8] sm:$0xff] %vm287, 0.0
      %s309 = scalar_lea.vmem [#allocation2], 216
      %310 = vst.msk [vmem:[%s309 + $0x8] sm:$0xff] %vm287, 0.0
      %s311 = scalar_lea.vmem [#allocation2], 24
      %312 = vst.msk [vmem:[%s311 + $0x8] sm:$0xff] %vm287, %v279
      %313 = vst.msk [vmem:[%s311 + $0x20] sm:$0xff] %vm287, %v280
      %314 = vst.msk [vmem:[%s311 + $0x38] sm:$0xff] %vm287, %v281
      %315 = vst.msk [vmem:[%s311 + $0x50] sm:$0xff] %vm287, %v282
      %316 = vst.msk [vmem:[%s311 + $0x68] sm:$0xff] %vm287, %v283
      %317 = vst.msk [vmem:[%s311 + $0x80] sm:$0xff] %vm287, %v284
      %318 = vst.msk [vmem:[%s311 + $0x98] sm:$0xff] %vm287, %v285
      %319 = vst.msk [vmem:[%s311 + $0xb0] sm:$0xff] %vm287, %v286
      %v320 = vld [vmem:[#allocation2 + $0x7] sm:$0xff]
      %v321 = vld [vmem:[#allocation2 + $0x1f] sm:$0xff]
      %v322 = vld [vmem:[#allocation2 + $0x37] sm:$0xff]
      %v323 = vld [vmem:[#allocation2 + $0x4f] sm:$0xff]
      %v324 = vld [vmem:[#allocation2 + $0x67] sm:$0xff]
      %v325 = vld [vmem:[#allocation2 + $0x7f] sm:$0xff]
      %v326 = vld [vmem:[#allocation2 + $0x97] sm:$0xff]
      %v327 = vld [vmem:[#allocation2 + $0xaf] sm:$0xff]
      %v328 = vld [vmem:[#allocation2 + $0x8] sm:$0xff]
      %v329 = vld [vmem:[#allocation2 + $0x20] sm:$0xff]
      %v330 = vld [vmem:[#allocation2 + $0x38] sm:$0xff]
      %v331 = vld [vmem:[#allocation2 + $0x50] sm:$0xff]
      %v332 = vld [vmem:[#allocation2 + $0x68] sm:$0xff]
      %v333 = vld [vmem:[#allocation2 + $0x80] sm:$0xff]
      %v334 = vld [vmem:[#allocation2 + $0x98] sm:$0xff]
      %v335 = vld [vmem:[#allocation2 + $0xb0] sm:$0xff]
      %v336 = vld [vmem:[#allocation2 + $0x9] sm:$0xff]
      %v337 = vld [vmem:[#allocation2 + $0x21] sm:$0xff]
      %v338 = vld [vmem:[#allocation2 + $0x39] sm:$0xff]
      %v339 = vld [vmem:[#allocation2 + $0x51] sm:$0xff]
      %v340 = vld [vmem:[#allocation2 + $0x69] sm:$0xff]
      %v341 = vld [vmem:[#allocation2 + $0x81] sm:$0xff]
      %v342 = vld [vmem:[#allocation2 + $0x99] sm:$0xff]
      %v343 = vld [vmem:[#allocation2 + $0xb1] sm:$0xff]
      %352 = vrot.lane.b32.xlu0 %v328, 4
      %v353 = vpop.permute.xlu0 %352
      %354 = vrot.lane.b32.xlu0 %v329, 4
      %v355 = vpop.permute.xlu0 %354
      %356 = vrot.lane.b32.xlu0 %v330, 4
      %v357 = vpop.permute.xlu0 %356
      %358 = vrot.lane.b32.xlu0 %v331, 4
      %v359 = vpop.permute.xlu0 %358
      %360 = vrot.lane.b32.xlu0 %v332, 4
      %v361 = vpop.permute.xlu0 %360
      %362 = vrot.lane.b32.xlu0 %v333, 4
      %v363 = vpop.permute.xlu0 %362
      %364 = vrot.lane.b32.xlu0 %v334, 4
      %v365 = vpop.permute.xlu0 %364
      %366 = vrot.lane.b32.xlu0 %v335, 4
      %v367 = vpop.permute.xlu0 %366
      %384 = vrot.lane.b32.xlu0 %v336, 8
      %v385 = vpop.permute.xlu0 %384
      %386 = vrot.lane.b32.xlu0 %v337, 8
      %v387 = vpop.permute.xlu0 %386
      %388 = vrot.lane.b32.xlu0 %v338, 8
      %v389 = vpop.permute.xlu0 %388
      %390 = vrot.lane.b32.xlu0 %v339, 8
      %v391 = vpop.permute.xlu0 %390
      %392 = vrot.lane.b32.xlu0 %v340, 8
      %v393 = vpop.permute.xlu0 %392
      %394 = vrot.lane.b32.xlu0 %v341, 8
      %v395 = vpop.permute.xlu0 %394
      %396 = vrot.lane.b32.xlu0 %v342, 8
      %v397 = vpop.permute.xlu0 %396
      %398 = vrot.lane.b32.xlu0 %v343, 8
      %v399 = vpop.permute.xlu0 %398
      %v408 = vsel %vm287, %v320, %v353
      %v409 = vsel %vm287, %v321, %v355
      %v410 = vsel %vm287, %v322, %v357
      %v411 = vsel %vm287, %v323, %v359
      %v412 = vsel %vm287, %v324, %v361
      %v413 = vsel %vm287, %v325, %v363
      %v414 = vsel %vm287, %v326, %v365
      %v415 = vsel %vm287, %v327, %v367
      %vm416 = vcmask 64512
      %v417 = vsel %vm416, %v408, %v385
      %v418 = vsel %vm416, %v409, %v387
      %v419 = vsel %vm416, %v410, %v389
      %v420 = vsel %vm416, %v411, %v391
      %v421 = vsel %vm416, %v412, %v393
      %v422 = vsel %vm416, %v413, %v395
      %v423 = vsel %vm416, %v414, %v397
      %v424 = vsel %vm416, %v415, %v399
      %v425 = vld [vmem:[%s1] sm:$0xff]
      %v426 = vld [vmem:[%s1 + $0x8] sm:$0xf]
      %v427 = vld [vmem:[%s311 + $0x7] sm:$0xff]
      %v428 = vld [vmem:[%s311 + $0x1f] sm:$0xff]
      %v429 = vld [vmem:[%s311 + $0x37] sm:$0xff]
      %v430 = vld [vmem:[%s311 + $0x4f] sm:$0xff]
      %v431 = vld [vmem:[%s311 + $0x67] sm:$0xff]
      %v432 = vld [vmem:[%s311 + $0x7f] sm:$0xff]
      %v433 = vld [vmem:[%s311 + $0x97] sm:$0xff]
      %v434 = vld [vmem:[%s311 + $0xaf] sm:$0xff]
      %v435 = vld [vmem:[%s311 + $0x8] sm:$0xff]
      %v436 = vld [vmem:[%s311 + $0x20] sm:$0xff]
      %v437 = vld [vmem:[%s311 + $0x38] sm:$0xff]
      %v438 = vld [vmem:[%s311 + $0x50] sm:$0xff]
      %v439 = vld [vmem:[%s311 + $0x68] sm:$0xff]
      %v440 = vld [vmem:[%s311 + $0x80] sm:$0xff]
      %v441 = vld [vmem:[%s311 + $0x98] sm:$0xff]
      %v442 = vld [vmem:[%s311 + $0xb0] sm:$0xff]
      %v443 = vld [vmem:[%s311 + $0x9] sm:$0xff]
      %v444 = vld [vmem:[%s311 + $0x21] sm:$0xff]
      %v445 = vld [vmem:[%s311 + $0x39] sm:$0xff]
      %v446 = vld [vmem:[%s311 + $0x51] sm:$0xff]
      %v447 = vld [vmem:[%s311 + $0x69] sm:$0xff]
      %v448 = vld [vmem:[%s311 + $0x81] sm:$0xff]
      %v449 = vld [vmem:[%s311 + $0x99] sm:$0xff]
      %v450 = vld [vmem:[%s311 + $0xb1] sm:$0xff]
      %459 = vrot.lane.b32.xlu0 %v435, 4
      %v460 = vpop.permute.xlu0 %459
      %461 = vrot.lane.b32.xlu0 %v436, 4
      %v462 = vpop.permute.xlu0 %461
      %463 = vrot.lane.b32.xlu0 %v437, 4
      %v464 = vpop.permute.xlu0 %463
      %465 = vrot.lane.b32.xlu0 %v438, 4
      %v466 = vpop.permute.xlu0 %465
      %467 = vrot.lane.b32.xlu0 %v439, 4
      %v468 = vpop.permute.xlu0 %467
      %469 = vrot.lane.b32.xlu0 %v440, 4
      %v470 = vpop.permute.xlu0 %469
      %471 = vrot.lane.b32.xlu0 %v441, 4
      %v472 = vpop.permute.xlu0 %471
      %473 = vrot.lane.b32.xlu0 %v442, 4
      %v474 = vpop.permute.xlu0 %473
      %491 = vrot.lane.b32.xlu0 %v443, 8
      %v492 = vpop.permute.xlu0 %491
      %493 = vrot.lane.b32.xlu0 %v444, 8
      %v494 = vpop.permute.xlu0 %493
      %495 = vrot.lane.b32.xlu0 %v445, 8
      %v496 = vpop.permute.xlu0 %495
      %497 = vrot.lane.b32.xlu0 %v446, 8
      %v498 = vpop.permute.xlu0 %497
      %499 = vrot.lane.b32.xlu0 %v447, 8
      %v500 = vpop.permute.xlu0 %499
      %501 = vrot.lane.b32.xlu0 %v448, 8
      %v502 = vpop.permute.xlu0 %501
      %503 = vrot.lane.b32.xlu0 %v449, 8
      %v504 = vpop.permute.xlu0 %503
      %505 = vrot.lane.b32.xlu0 %v450, 8
      %v506 = vpop.permute.xlu0 %505
      %v515 = vsel %vm287, %v427, %v460
      %v516 = vsel %vm287, %v428, %v462
      %v517 = vsel %vm287, %v429, %v464
      %v518 = vsel %vm287, %v430, %v466
      %v519 = vsel %vm287, %v431, %v468
      %v520 = vsel %vm287, %v432, %v470
      %v521 = vsel %vm287, %v433, %v472
      %v522 = vsel %vm287, %v434, %v474
      %v523 = vsel %vm416, %v515, %v492
      %v524 = vsel %vm416, %v516, %v494
      %v525 = vsel %vm416, %v517, %v496
      %v526 = vsel %vm416, %v518, %v498
      %v527 = vsel %vm416, %v519, %v500
      %v528 = vsel %vm416, %v520, %v502
      %v529 = vsel %vm416, %v521, %v504
      %v530 = vsel %vm416, %v522, %v506
      %v531 = vld [vmem:[%s1 + $0xc] sm:$0xff]
      %v532 = vld [vmem:[%s1 + $0x14] sm:$0xf]
      %vm533 = vcmask 97280
      %v535 = vsel %vm533, %v523, 0
      %v538 = vsel %vm533, %v524, 0
      %v541 = vsel %vm533, %v525, 0
      %v544 = vsel %vm533, %v526, 0
      %v547 = vsel %vm533, %v527, 0
      %v550 = vsel %vm533, %v528, 0
      %v553 = vsel %vm533, %v529, 0
      %v556 = vsel %vm533, %v530, 0
      %vm558 = vcmask 1043456
      %v560 = vsel %vm558, %v532, 0
      %562 = vmatprep.subr.mxu0 0.0
      %563 = vmatpush1.msra.mxu0 %v531
      %564 = vmatprep.subr.mxu0 0.0
      %565 = vmatpush1.msra.mxu0 %v560
      %566 = vmatprep.subr.mxu0 0.0
      %567 = vmatpush1.msra.mxu0 0.0
      %568 = vmatprep.subr.mxu0 0.0
      %569 = vmatpush1.msra.mxu0 0.0
      %570 = vmatprep.subr.mxu0 0.0
      %571 = vmatpush1.msra.mxu0 0.0
      %572 = vmatprep.subr.mxu0 0.0
      %573 = vmatpush1.msra.mxu0 0.0
      %574 = vmatprep.subr.mxu0 0.0
      %575 = vmatpush1.msra.mxu0 0.0
      %576 = vmatprep.subr.mxu0 0.0
      %577 = vmatpush1.msra.mxu0 0.0
      %578 = vmatprep.subr.mxu0 0.0
      %579 = vmatpush1.msra.mxu0 0.0
      %580 = vmatprep.subr.mxu0 0.0
      %581 = vmatpush1.msra.mxu0 0.0
      %582 = vmatprep.subr.mxu0 0.0
      %583 = vmatpush1.msra.mxu0 0.0
      %584 = vmatprep.subr.mxu0 0.0
      %585 = vmatpush1.msra.mxu0 0.0
      %586 = vmatprep.subr.mxu0 0.0
      %587 = vmatpush1.msra.mxu0 0.0
      %588 = vmatprep.subr.mxu0 0.0
      %589 = vmatpush1.msra.mxu0 0.0
      %590 = vmatprep.subr.mxu0 0.0
      %591 = vmatpush1.msra.mxu0 0.0
      %592 = vmatprep.subr.mxu0 0.0
      %593 = vmatpush1.msra.mxu0 0.0
      %594 = vmatprep.subr.mxu0 0.0
      %595 = vmatpush1.msra.mxu0 0.0
      %596 = vmatprep.subr.mxu0 0.0
      %597 = vmatpush1.msra.mxu0 0.0
      %598 = vmatprep.subr.mxu0 0.0
      %599 = vmatpush1.msra.mxu0 0.0
      %600 = vmatprep.subr.mxu0 0.0
      %601 = vmatpush1.msra.mxu0 0.0
      %602 = vmatprep.subr.mxu0 0.0
      %603 = vmatpush1.msra.mxu0 0.0
      %604 = vmatprep.subr.mxu0 0.0
      %605 = vmatpush1.msra.mxu0 0.0
      %606 = vmatprep.subr.mxu0 0.0
      %607 = vmatpush1.msra.mxu0 0.0
      %608 = vmatprep.subr.mxu0 0.0
      %609 = vmatpush1.msra.mxu0 0.0
      %610 = vmatprep.subr.mxu0 0.0
      %611 = vmatpush1.msra.mxu0 0.0
      %612 = vmatprep.subr.mxu0 0.0
      %613 = vmatpush1.msra.mxu0 0.0
      %614 = vmatprep.subr.mxu0 0.0
      %615 = vmatpush1.msra.mxu0 0.0
      %616 = vmatprep.subr.mxu0 0.0
      %617 = vmatpush1.msra.mxu0 0.0
      %618 = vmatprep.subr.mxu0 0.0
      %619 = vmatpush1.msra.mxu0 0.0
      %620 = vmatprep.subr.mxu0 0.0
      %621 = vmatpush1.msra.mxu0 0.0
      %622 = vmatprep.subr.mxu0 0.0
      %623 = vmatpush1.msra.mxu0 0.0
      %624 = vmatprep.subr.mxu0 0.0
      %625 = vmatpush1.msra.mxu0 0.0
      %626 = vmatprep.mubr.f32.mxu0 0.0
      %627 = vmatmul.mubr.f32.gmra.mrb[0].mxu0 %v535
      %v628 = vpop.f32.mrb[0].mxu0
      %v629 = vadd.f32 0.0, %v628
      %v630 = vpop.f32.mrb[0].mxu0
      %631 = vmatprep.mubr.f32.mxu0 0.0
      %632 = vmatmul.mubr.f32.gmra.mrb[0].mxu0 %v538
      %v633 = vpop.f32.mrb[0].mxu0
      %v634 = vadd.f32 0.0, %v633
      %v635 = vpop.f32.mrb[0].mxu0
      %636 = vmatprep.mubr.f32.mxu0 0.0
      %637 = vmatmul.mubr.f32.gmra.mrb[0].mxu0 %v541
      %v638 = vpop.f32.mrb[0].mxu0
      %v639 = vadd.f32 0.0, %v638
      %v640 = vpop.f32.mrb[0].mxu0
      %641 = vmatprep.mubr.f32.mxu0 0.0
      %642 = vmatmul.mubr.f32.gmra.mrb[0].mxu0 %v544
      %v643 = vpop.f32.mrb[0].mxu0
      %v644 = vadd.f32 0.0, %v643
      %v645 = vpop.f32.mrb[0].mxu0
      %646 = vmatprep.mubr.f32.mxu0 0.0
      %647 = vmatmul.mubr.f32.gmra.mrb[0].mxu0 %v547
      %v648 = vpop.f32.mrb[0].mxu0
      %v649 = vadd.f32 0.0, %v648
      %v650 = vpop.f32.mrb[0].mxu0
      %651 = vmatprep.mubr.f32.mxu0 0.0
      %652 = vmatmul.mubr.f32.gmra.mrb[0].mxu0 %v550
      %v653 = vpop.f32.mrb[0].mxu0
      %v654 = vadd.f32 0.0, %v653
      %v655 = vpop.f32.mrb[0].mxu0
      %656 = vmatprep.mubr.f32.mxu0 0.0
      %657 = vmatmul.mubr.f32.gmra.mrb[0].mxu0 %v553
      %v658 = vpop.f32.mrb[0].mxu0
      %v659 = vadd.f32 0.0, %v658
      %v660 = vpop.f32.mrb[0].mxu0
      %661 = vmatprep.mubr.f32.mxu0 0.0
      %662 = vmatmul.mubr.f32.gmra.mrb[0].mxu0 %v556
      %v663 = vpop.f32.mrb[0].mxu0
      %v664 = vadd.f32 0.0, %v663
      %v665 = vpop.f32.mrb[0].mxu0
      %666 = vdwg.mxu0
      %v668 = vsel %vm533, %v417, 0
      %v671 = vsel %vm533, %v418, 0
      %v674 = vsel %vm533, %v419, 0
      %v677 = vsel %vm533, %v420, 0
      %v680 = vsel %vm533, %v421, 0
      %v683 = vsel %vm533, %v422, 0
      %v686 = vsel %vm533, %v423, 0
      %v689 = vsel %vm533, %v424, 0
      %v692 = vsel %vm558, %v426, 0
      %694 = vmatprep.subr.mxu0 0.0
      %695 = vmatpush1.msra.mxu0 %v425
      %696 = vmatprep.subr.mxu0 0.0
      %697 = vmatpush1.msra.mxu0 %v692
      %698 = vmatprep.subr.mxu0 0.0
      %699 = vmatpush1.msra.mxu0 0.0
      %700 = vmatprep.subr.mxu0 0.0
      %701 = vmatpush1.msra.mxu0 0.0
      %702 = vmatprep.subr.mxu0 0.0
      %703 = vmatpush1.msra.mxu0 0.0
      %704 = vmatprep.subr.mxu0 0.0
      %705 = vmatpush1.msra.mxu0 0.0
      %706 = vmatprep.subr.mxu0 0.0
      %707 = vmatpush1.msra.mxu0 0.0
      %708 = vmatprep.subr.mxu0 0.0
      %709 = vmatpush1.msra.mxu0 0.0
      %710 = vmatprep.subr.mxu0 0.0
      %711 = vmatpush1.msra.mxu0 0.0
      %712 = vmatprep.subr.mxu0 0.0
      %713 = vmatpush1.msra.mxu0 0.0
      %714 = vmatprep.subr.mxu0 0.0
      %715 = vmatpush1.msra.mxu0 0.0
      %716 = vmatprep.subr.mxu0 0.0
      %717 = vmatpush1.msra.mxu0 0.0
      %718 = vmatprep.subr.mxu0 0.0
      %719 = vmatpush1.msra.mxu0 0.0
      %720 = vmatprep.subr.mxu0 0.0
      %721 = vmatpush1.msra.mxu0 0.0
      %722 = vmatprep.subr.mxu0 0.0
      %723 = vmatpush1.msra.mxu0 0.0
      %724 = vmatprep.subr.mxu0 0.0
      %725 = vmatpush1.msra.mxu0 0.0
      %726 = vmatprep.subr.mxu0 0.0
      %727 = vmatpush1.msra.mxu0 0.0
      %728 = vmatprep.subr.mxu0 0.0
      %729 = vmatpush1.msra.mxu0 0.0
      %730 = vmatprep.subr.mxu0 0.0
      %731 = vmatpush1.msra.mxu0 0.0
      %732 = vmatprep.subr.mxu0 0.0
      %733 = vmatpush1.msra.mxu0 0.0
      %734 = vmatprep.subr.mxu0 0.0
      %735 = vmatpush1.msra.mxu0 0.0
      %736 = vmatprep.subr.mxu0 0.0
      %737 = vmatpush1.msra.mxu0 0.0
      %738 = vmatprep.subr.mxu0 0.0
      %739 = vmatpush1.msra.mxu0 0.0
      %740 = vmatprep.subr.mxu0 0.0
      %741 = vmatpush1.msra.mxu0 0.0
      %742 = vmatprep.subr.mxu0 0.0
      %743 = vmatpush1.msra.mxu0 0.0
      %744 = vmatprep.subr.mxu0 0.0
      %745 = vmatpush1.msra.mxu0 0.0
      %746 = vmatprep.subr.mxu0 0.0
      %747 = vmatpush1.msra.mxu0 0.0
      %748 = vmatprep.subr.mxu0 0.0
      %749 = vmatpush1.msra.mxu0 0.0
      %750 = vmatprep.subr.mxu0 0.0
      %751 = vmatpush1.msra.mxu0 0.0
      %752 = vmatprep.subr.mxu0 0.0
      %753 = vmatpush1.msra.mxu0 0.0
      %754 = vmatprep.subr.mxu0 0.0
      %755 = vmatpush1.msra.mxu0 0.0
      %756 = vmatprep.subr.mxu0 0.0
      %757 = vmatpush1.msra.mxu0 0.0
      %758 = vmatprep.mubr.f32.mxu0 0.0
      %759 = vmatmul.mubr.f32.gmra.mrb[0].mxu0 %v668
      %v760 = vpop.f32.mrb[0].mxu0
      %v761 = vadd.f32 %v629, %v760
      %v762 = vpop.f32.mrb[0].mxu0
      %763 = vmatprep.mubr.f32.mxu0 0.0
      %764 = vmatmul.mubr.f32.gmra.mrb[0].mxu0 %v671
      %v765 = vpop.f32.mrb[0].mxu0
      %v766 = vadd.f32 %v634, %v765
      %v767 = vpop.f32.mrb[0].mxu0
      %768 = vmatprep.mubr.f32.mxu0 0.0
      %769 = vmatmul.mubr.f32.gmra.mrb[0].mxu0 %v674
      %v770 = vpop.f32.mrb[0].mxu0
      %v771 = vadd.f32 %v639, %v770
      %v772 = vpop.f32.mrb[0].mxu0
      %773 = vmatprep.mubr.f32.mxu0 0.0
      %774 = vmatmul.mubr.f32.gmra.mrb[0].mxu0 %v677
      %v775 = vpop.f32.mrb[0].mxu0
      %v776 = vadd.f32 %v644, %v775
      %v777 = vpop.f32.mrb[0].mxu0
      %778 = vmatprep.mubr.f32.mxu0 0.0
      %779 = vmatmul.mubr.f32.gmra.mrb[0].mxu0 %v680
      %v780 = vpop.f32.mrb[0].mxu0
      %v781 = vadd.f32 %v649, %v780
      %v782 = vpop.f32.mrb[0].mxu0
      %783 = vmatprep.mubr.f32.mxu0 0.0
      %784 = vmatmul.mubr.f32.gmra.mrb[0].mxu0 %v683
      %v785 = vpop.f32.mrb[0].mxu0
      %v786 = vadd.f32 %v654, %v785
      %v787 = vpop.f32.mrb[0].mxu0
      %788 = vmatprep.mubr.f32.mxu0 0.0
      %789 = vmatmul.mubr.f32.gmra.mrb[0].mxu0 %v686
      %v790 = vpop.f32.mrb[0].mxu0
      %v791 = vadd.f32 %v659, %v790
      %v792 = vpop.f32.mrb[0].mxu0
      %793 = vmatprep.mubr.f32.mxu0 0.0
      %794 = vmatmul.mubr.f32.gmra.mrb[0].mxu0 %v689
      %v795 = vpop.f32.mrb[0].mxu0
      %v796 = vadd.f32 %v664, %v795
      %v797 = vpop.f32.mrb[0].mxu0
      %798 = vdwg.mxu0
      %s799 = scalar_lea.vmem [#allocation2], 48
      %v800 = vld [vmem:[%s799 + $0x7] sm:$0xff]
      %v801 = vld [vmem:[%s799 + $0x1f] sm:$0xff]
      %v802 = vld [vmem:[%s799 + $0x37] sm:$0xff]
      %v803 = vld [vmem:[%s799 + $0x4f] sm:$0xff]
      %v804 = vld [vmem:[%s799 + $0x67] sm:$0xff]
      %v805 = vld [vmem:[%s799 + $0x7f] sm:$0xff]
      %v806 = vld [vmem:[%s799 + $0x97] sm:$0xff]
      %v807 = vld [vmem:[%s799 + $0xaf] sm:$0xff]
      %v808 = vld [vmem:[%s799 + $0x8] sm:$0xff]
      %v809 = vld [vmem:[%s799 + $0x20] sm:$0xff]
      %v810 = vld [vmem:[%s799 + $0x38] sm:$0xff]
      %v811 = vld [vmem:[%s799 + $0x50] sm:$0xff]
      %v812 = vld [vmem:[%s799 + $0x68] sm:$0xff]
      %v813 = vld [vmem:[%s799 + $0x80] sm:$0xff]
      %v814 = vld [vmem:[%s799 + $0x98] sm:$0xff]
      %v815 = vld [vmem:[%s799 + $0xb0] sm:$0xff]
      %v816 = vld [vmem:[%s799 + $0x9] sm:$0xff]
      %v817 = vld [vmem:[%s799 + $0x21] sm:$0xff]
      %v818 = vld [vmem:[%s799 + $0x39] sm:$0xff]
      %v819 = vld [vmem:[%s799 + $0x51] sm:$0xff]
      %v820 = vld [vmem:[%s799 + $0x69] sm:$0xff]
      %v821 = vld [vmem:[%s799 + $0x81] sm:$0xff]
      %v822 = vld [vmem:[%s799 + $0x99] sm:$0xff]
      %v823 = vld [vmem:[%s799 + $0xb1] sm:$0xff]
      %832 = vrot.lane.b32.xlu0 %v808, 4
      %v833 = vpop.permute.xlu0 %832
      %834 = vrot.lane.b32.xlu0 %v809, 4
      %v835 = vpop.permute.xlu0 %834
      %836 = vrot.lane.b32.xlu0 %v810, 4
      %v837 = vpop.permute.xlu0 %836
      %838 = vrot.lane.b32.xlu0 %v811, 4
      %v839 = vpop.permute.xlu0 %838
      %840 = vrot.lane.b32.xlu0 %v812, 4
      %v841 = vpop.permute.xlu0 %840
      %842 = vrot.lane.b32.xlu0 %v813, 4
      %v843 = vpop.permute.xlu0 %842
      %844 = vrot.lane.b32.xlu0 %v814, 4
      %v845 = vpop.permute.xlu0 %844
      %846 = vrot.lane.b32.xlu0 %v815, 4
      %v847 = vpop.permute.xlu0 %846
      %864 = vrot.lane.b32.xlu0 %v816, 8
      %v865 = vpop.permute.xlu0 %864
      %866 = vrot.lane.b32.xlu0 %v817, 8
      %v867 = vpop.permute.xlu0 %866
      %868 = vrot.lane.b32.xlu0 %v818, 8
      %v869 = vpop.permute.xlu0 %868
      %870 = vrot.lane.b32.xlu0 %v819, 8
      %v871 = vpop.permute.xlu0 %870
      %872 = vrot.lane.b32.xlu0 %v820, 8
      %v873 = vpop.permute.xlu0 %872
      %874 = vrot.lane.b32.xlu0 %v821, 8
      %v875 = vpop.permute.xlu0 %874
      %876 = vrot.lane.b32.xlu0 %v822, 8
      %v877 = vpop.permute.xlu0 %876
      %878 = vrot.lane.b32.xlu0 %v823, 8
      %v879 = vpop.permute.xlu0 %878
      %v888 = vsel %vm287, %v800, %v833
      %v889 = vsel %vm287, %v801, %v835
      %v890 = vsel %vm287, %v802, %v837
      %v891 = vsel %vm287, %v803, %v839
      %v892 = vsel %vm287, %v804, %v841
      %v893 = vsel %vm287, %v805, %v843
      %v894 = vsel %vm287, %v806, %v845
      %v895 = vsel %vm287, %v807, %v847
      %v896 = vsel %vm416, %v888, %v865
      %v897 = vsel %vm416, %v889, %v867
      %v898 = vsel %vm416, %v890, %v869
      %v899 = vsel %vm416, %v891, %v871
      %v900 = vsel %vm416, %v892, %v873
      %v901 = vsel %vm416, %v893, %v875
      %v902 = vsel %vm416, %v894, %v877
      %v903 = vsel %vm416, %v895, %v879
      %v904 = vld [vmem:[%s1 + $0x18] sm:$0xff]
      %v905 = vld [vmem:[%s1 + $0x20] sm:$0xf]
      %v907 = vsel %vm533, %v896, 0
      %v910 = vsel %vm533, %v897, 0
      %v913 = vsel %vm533, %v898, 0
      %v916 = vsel %vm533, %v899, 0
      %v919 = vsel %vm533, %v900, 0
      %v922 = vsel %vm533, %v901, 0
      %v925 = vsel %vm533, %v902, 0
      %v928 = vsel %vm533, %v903, 0
      %v931 = vsel %vm558, %v905, 0
      %933 = vmatprep.subr.mxu0 0.0
      %934 = vmatpush1.msra.mxu0 %v904
      %935 = vmatprep.subr.mxu0 0.0
      %936 = vmatpush1.msra.mxu0 %v931
      %937 = vmatprep.subr.mxu0 0.0
      %938 = vmatpush1.msra.mxu0 0.0
      %939 = vmatprep.subr.mxu0 0.0
      %940 = vmatpush1.msra.mxu0 0.0
      %941 = vmatprep.subr.mxu0 0.0
      %942 = vmatpush1.msra.mxu0 0.0
      %943 = vmatprep.subr.mxu0 0.0
      %944 = vmatpush1.msra.mxu0 0.0
      %945 = vmatprep.subr.mxu0 0.0
      %946 = vmatpush1.msra.mxu0 0.0
      %947 = vmatprep.subr.mxu0 0.0
      %948 = vmatpush1.msra.mxu0 0.0
      %949 = vmatprep.subr.mxu0 0.0
      %950 = vmatpush1.msra.mxu0 0.0
      %951 = vmatprep.subr.mxu0 0.0
      %952 = vmatpush1.msra.mxu0 0.0
      %953 = vmatprep.subr.mxu0 0.0
      %954 = vmatpush1.msra.mxu0 0.0
      %955 = vmatprep.subr.mxu0 0.0
      %956 = vmatpush1.msra.mxu0 0.0
      %957 = vmatprep.subr.mxu0 0.0
      %958 = vmatpush1.msra.mxu0 0.0
      %959 = vmatprep.subr.mxu0 0.0
      %960 = vmatpush1.msra.mxu0 0.0
      %961 = vmatprep.subr.mxu0 0.0
      %962 = vmatpush1.msra.mxu0 0.0
      %963 = vmatprep.subr.mxu0 0.0
      %964 = vmatpush1.msra.mxu0 0.0
      %965 = vmatprep.subr.mxu0 0.0
      %966 = vmatpush1.msra.mxu0 0.0
      %967 = vmatprep.subr.mxu0 0.0
      %968 = vmatpush1.msra.mxu0 0.0
      %969 = vmatprep.subr.mxu0 0.0
      %970 = vmatpush1.msra.mxu0 0.0
      %971 = vmatprep.subr.mxu0 0.0
      %972 = vmatpush1.msra.mxu0 0.0
      %973 = vmatprep.subr.mxu0 0.0
      %974 = vmatpush1.msra.mxu0 0.0
      %975 = vmatprep.subr.mxu0 0.0
      %976 = vmatpush1.msra.mxu0 0.0
      %977 = vmatprep.subr.mxu0 0.0
      %978 = vmatpush1.msra.mxu0 0.0
      %979 = vmatprep.subr.mxu0 0.0
      %980 = vmatpush1.msra.mxu0 0.0
      %981 = vmatprep.subr.mxu0 0.0
      %982 = vmatpush1.msra.mxu0 0.0
      %983 = vmatprep.subr.mxu0 0.0
      %984 = vmatpush1.msra.mxu0 0.0
      %985 = vmatprep.subr.mxu0 0.0
      %986 = vmatpush1.msra.mxu0 0.0
      %987 = vmatprep.subr.mxu0 0.0
      %988 = vmatpush1.msra.mxu0 0.0
      %989 = vmatprep.subr.mxu0 0.0
      %990 = vmatpush1.msra.mxu0 0.0
      %991 = vmatprep.subr.mxu0 0.0
      %992 = vmatpush1.msra.mxu0 0.0
      %993 = vmatprep.subr.mxu0 0.0
      %994 = vmatpush1.msra.mxu0 0.0
      %995 = vmatprep.subr.mxu0 0.0
      %996 = vmatpush1.msra.mxu0 0.0
      %997 = vmatprep.mubr.f32.mxu0 0.0
      %998 = vmatmul.mubr.f32.gmra.mrb[0].mxu0 %v907
      %v999 = vpop.f32.mrb[0].mxu0
      %v1000 = vadd.f32 0.0, %v999
      %v1001 = vpop.f32.mrb[0].mxu0
      %1002 = vmatprep.mubr.f32.mxu0 0.0
      %1003 = vmatmul.mubr.f32.gmra.mrb[0].mxu0 %v910
      %v1004 = vpop.f32.mrb[0].mxu0
      %v1005 = vadd.f32 0.0, %v1004
      %v1006 = vpop.f32.mrb[0].mxu0
      %1007 = vmatprep.mubr.f32.mxu0 0.0
      %1008 = vmatmul.mubr.f32.gmra.mrb[0].mxu0 %v913
      %v1009 = vpop.f32.mrb[0].mxu0
      %v1010 = vadd.f32 0.0, %v1009
      %v1011 = vpop.f32.mrb[0].mxu0
      %1012 = vmatprep.mubr.f32.mxu0 0.0
      %1013 = vmatmul.mubr.f32.gmra.mrb[0].mxu0 %v916
      %v1014 = vpop.f32.mrb[0].mxu0
      %v1015 = vadd.f32 0.0, %v1014
      %v1016 = vpop.f32.mrb[0].mxu0
      %1017 = vmatprep.mubr.f32.mxu0 0.0
      %1018 = vmatmul.mubr.f32.gmra.mrb[0].mxu0 %v919
      %v1019 = vpop.f32.mrb[0].mxu0
      %v1020 = vadd.f32 0.0, %v1019
      %v1021 = vpop.f32.mrb[0].mxu0
      %1022 = vmatprep.mubr.f32.mxu0 0.0
      %1023 = vmatmul.mubr.f32.gmra.mrb[0].mxu0 %v922
      %v1024 = vpop.f32.mrb[0].mxu0
      %v1025 = vadd.f32 0.0, %v1024
      %v1026 = vpop.f32.mrb[0].mxu0
      %1027 = vmatprep.mubr.f32.mxu0 0.0
      %1028 = vmatmul.mubr.f32.gmra.mrb[0].mxu0 %v925
      %v1029 = vpop.f32.mrb[0].mxu0
      %v1030 = vadd.f32 0.0, %v1029
      %v1031 = vpop.f32.mrb[0].mxu0
      %1032 = vmatprep.mubr.f32.mxu0 0.0
      %1033 = vmatmul.mubr.f32.gmra.mrb[0].mxu0 %v928
      %v1034 = vpop.f32.mrb[0].mxu0
      %v1035 = vadd.f32 0.0, %v1034
      %v1036 = vpop.f32.mrb[0].mxu0
      %1037 = vdwg.mxu0
      %v1038 = vadd.f32 %v761, %v1000
      %v1039 = vadd.f32 %v766, %v1005
      %v1040 = vadd.f32 %v771, %v1010
      %v1041 = vadd.f32 %v776, %v1015
      %v1042 = vadd.f32 %v781, %v1020
      %v1043 = vadd.f32 %v786, %v1025
      %v1044 = vadd.f32 %v791, %v1030
      %v1045 = vadd.f32 %v796, %v1035
      %v1046 = vld [vmem:[%s2] sm:$0x1]
      %v1048 = vlaneseq
      %v1049 = vshrl.u32 %v1048, 7
      %v1050 = vsub.s32 0, %v1049
      %v1051 = vrot.slane %v1046, %v1050
      %v1053 = vadd.f32 %v1038, %v1051
      %v1054 = vadd.f32 %v1039, %v1051
      %v1055 = vadd.f32 %v1040, %v1051
      %v1056 = vadd.f32 %v1041, %v1051
      %v1057 = vadd.f32 %v1042, %v1051
      %v1058 = vadd.f32 %v1043, %v1051
      %v1059 = vadd.f32 %v1044, %v1051
      %v1060 = vadd.f32 %v1045, %v1051
      %v1061 = vmax.f32 %v1053, 0.0
      %v1062 = vmax.f32 %v1054, 0.0
      %v1063 = vmax.f32 %v1055, 0.0
      %v1064 = vmax.f32 %v1056, 0.0
      %v1065 = vmax.f32 %v1057, 0.0
      %v1066 = vmax.f32 %v1058, 0.0
      %v1067 = vmax.f32 %v1059, 0.0
      %v1068 = vmax.f32 %v1060, 0.0
      %1069 = vst.msk [vmem:[#allocation3] sm:$0xff] %vm416, 0.0
      %1070 = vst.msk [vmem:[#allocation3 + $0x18] sm:$0xff] %vm416, 0.0
      %1071 = vst.msk [vmem:[#allocation3 + $0x30] sm:$0xff] %vm416, 0.0
      %1072 = vst.msk [vmem:[#allocation3 + $0x48] sm:$0xff] %vm416, 0.0
      %1073 = vst.msk [vmem:[#allocation3 + $0x60] sm:$0xff] %vm416, 0.0
      %1074 = vst.msk [vmem:[#allocation3 + $0x78] sm:$0xff] %vm416, 0.0
      %1075 = vst.msk [vmem:[#allocation3 + $0x90] sm:$0xff] %vm416, 0.0
      %1076 = vst.msk [vmem:[#allocation3 + $0xa8] sm:$0xff] %vm416, 0.0
      %1077 = vst.msk [vmem:[#allocation3 + $0xc0] sm:$0xff] %vm416, 0.0
      %1078 = vst.msk [vmem:[#allocation3 + $0xd8] sm:$0xff] %vm416, 0.0
      %1079 = vst.msk [vmem:[#allocation3 + $0x10] sm:$0xff] %vm416, 0.0
      %1080 = vst.msk [vmem:[#allocation3 + $0x28] sm:$0xff] %vm416, 0.0
      %1081 = vst.msk [vmem:[#allocation3 + $0x40] sm:$0xff] %vm416, 0.0
      %1082 = vst.msk [vmem:[#allocation3 + $0x58] sm:$0xff] %vm416, 0.0
      %1083 = vst.msk [vmem:[#allocation3 + $0x70] sm:$0xff] %vm416, 0.0
      %1084 = vst.msk [vmem:[#allocation3 + $0x88] sm:$0xff] %vm416, 0.0
      %1085 = vst.msk [vmem:[#allocation3 + $0xa0] sm:$0xff] %vm416, 0.0
      %1086 = vst.msk [vmem:[#allocation3 + $0xb8] sm:$0xff] %vm416, 0.0
      %1087 = vst.msk [vmem:[#allocation3 + $0xd0] sm:$0xff] %vm416, 0.0
      %1088 = vst.msk [vmem:[#allocation3 + $0xe8] sm:$0xff] %vm416, 0.0
      %1089 = vst.msk [vmem:[#allocation3 + $0x8] sm:$0xff] %vm416, 0.0
      %s1090 = scalar_lea.vmem [#allocation3], 216
      %1091 = vst.msk [vmem:[%s1090 + $0x8] sm:$0xff] %vm416, 0.0
      %s1092 = scalar_lea.vmem [#allocation3], 24
      %1093 = vst.msk [vmem:[%s1092 + $0x8] sm:$0xff] %vm416, %v1061
      %1094 = vst.msk [vmem:[%s1092 + $0x20] sm:$0xff] %vm416, %v1062
      %1095 = vst.msk [vmem:[%s1092 + $0x38] sm:$0xff] %vm416, %v1063
      %1096 = vst.msk [vmem:[%s1092 + $0x50] sm:$0xff] %vm416, %v1064
      %1097 = vst.msk [vmem:[%s1092 + $0x68] sm:$0xff] %vm416, %v1065
      %1098 = vst.msk [vmem:[%s1092 + $0x80] sm:$0xff] %vm416, %v1066
      %1099 = vst.msk [vmem:[%s1092 + $0x98] sm:$0xff] %vm416, %v1067
      %1100 = vst.msk [vmem:[%s1092 + $0xb0] sm:$0xff] %vm416, %v1068
      %v1101 = vld [vmem:[#allocation3 + $0x7] sm:$0xff]
      %v1102 = vld [vmem:[#allocation3 + $0x1f] sm:$0xff]
      %v1103 = vld [vmem:[#allocation3 + $0x37] sm:$0xff]
      %v1104 = vld [vmem:[#allocation3 + $0x4f] sm:$0xff]
      %v1105 = vld [vmem:[#allocation3 + $0x67] sm:$0xff]
      %v1106 = vld [vmem:[#allocation3 + $0x7f] sm:$0xff]
      %v1107 = vld [vmem:[#allocation3 + $0x97] sm:$0xff]
      %v1108 = vld [vmem:[#allocation3 + $0xaf] sm:$0xff]
      %v1109 = vld [vmem:[#allocation3 + $0x8] sm:$0xff]
      %v1110 = vld [vmem:[#allocation3 + $0x20] sm:$0xff]
      %v1111 = vld [vmem:[#allocation3 + $0x38] sm:$0xff]
      %v1112 = vld [vmem:[#allocation3 + $0x50] sm:$0xff]
      %v1113 = vld [vmem:[#allocation3 + $0x68] sm:$0xff]
      %v1114 = vld [vmem:[#allocation3 + $0x80] sm:$0xff]
      %v1115 = vld [vmem:[#allocation3 + $0x98] sm:$0xff]
      %v1116 = vld [vmem:[#allocation3 + $0xb0] sm:$0xff]
      %v1117 = vld [vmem:[#allocation3 + $0x9] sm:$0xff]
      %v1118 = vld [vmem:[#allocation3 + $0x21] sm:$0xff]
      %v1119 = vld [vmem:[#allocation3 + $0x39] sm:$0xff]
      %v1120 = vld [vmem:[#allocation3 + $0x51] sm:$0xff]
      %v1121 = vld [vmem:[#allocation3 + $0x69] sm:$0xff]
      %v1122 = vld [vmem:[#allocation3 + $0x81] sm:$0xff]
      %v1123 = vld [vmem:[#allocation3 + $0x99] sm:$0xff]
      %v1124 = vld [vmem:[#allocation3 + $0xb1] sm:$0xff]
      %1133 = vrot.lane.b32.xlu0 %v1109, 8
      %v1134 = vpop.permute.xlu0 %1133
      %1135 = vrot.lane.b32.xlu0 %v1110, 8
      %v1136 = vpop.permute.xlu0 %1135
      %1137 = vrot.lane.b32.xlu0 %v1111, 8
      %v1138 = vpop.permute.xlu0 %1137
      %1139 = vrot.lane.b32.xlu0 %v1112, 8
      %v1140 = vpop.permute.xlu0 %1139
      %1141 = vrot.lane.b32.xlu0 %v1113, 8
      %v1142 = vpop.permute.xlu0 %1141
      %1143 = vrot.lane.b32.xlu0 %v1114, 8
      %v1144 = vpop.permute.xlu0 %1143
      %1145 = vrot.lane.b32.xlu0 %v1115, 8
      %v1146 = vpop.permute.xlu0 %1145
      %1147 = vrot.lane.b32.xlu0 %v1116, 8
      %v1148 = vpop.permute.xlu0 %1147
      %1165 = vrot.lane.b32.xlu0 %v1117, 16
      %v1166 = vpop.permute.xlu0 %1165
      %1167 = vrot.lane.b32.xlu0 %v1118, 16
      %v1168 = vpop.permute.xlu0 %1167
      %1169 = vrot.lane.b32.xlu0 %v1119, 16
      %v1170 = vpop.permute.xlu0 %1169
      %1171 = vrot.lane.b32.xlu0 %v1120, 16
      %v1172 = vpop.permute.xlu0 %1171
      %1173 = vrot.lane.b32.xlu0 %v1121, 16
      %v1174 = vpop.permute.xlu0 %1173
      %1175 = vrot.lane.b32.xlu0 %v1122, 16
      %v1176 = vpop.permute.xlu0 %1175
      %1177 = vrot.lane.b32.xlu0 %v1123, 16
      %v1178 = vpop.permute.xlu0 %1177
      %1179 = vrot.lane.b32.xlu0 %v1124, 16
      %v1180 = vpop.permute.xlu0 %1179
      %v1189 = vsel %vm416, %v1101, %v1134
      %v1190 = vsel %vm416, %v1102, %v1136
      %v1191 = vsel %vm416, %v1103, %v1138
      %v1192 = vsel %vm416, %v1104, %v1140
      %v1193 = vsel %vm416, %v1105, %v1142
      %v1194 = vsel %vm416, %v1106, %v1144
      %v1195 = vsel %vm416, %v1107, %v1146
      %v1196 = vsel %vm416, %v1108, %v1148
      %vm1197 = vcmask 130048
      %v1198 = vsel %vm1197, %v1189, %v1166
      %v1199 = vsel %vm1197, %v1190, %v1168
      %v1200 = vsel %vm1197, %v1191, %v1170
      %v1201 = vsel %vm1197, %v1192, %v1172
      %v1202 = vsel %vm1197, %v1193, %v1174
      %v1203 = vsel %vm1197, %v1194, %v1176
      %v1204 = vsel %vm1197, %v1195, %v1178
      %v1205 = vsel %vm1197, %v1196, %v1180
      %v1206 = vld [vmem:[%s3] sm:$0xff]
      %v1207 = vld [vmem:[%s3 + $0x8] sm:$0xff]
      %v1208 = vld [vmem:[%s3 + $0x10] sm:$0xff]
      %v1209 = vld [vmem:[%s1092 + $0x7] sm:$0xff]
      %v1210 = vld [vmem:[%s1092 + $0x1f] sm:$0xff]
      %v1211 = vld [vmem:[%s1092 + $0x37] sm:$0xff]
      %v1212 = vld [vmem:[%s1092 + $0x4f] sm:$0xff]
      %v1213 = vld [vmem:[%s1092 + $0x67] sm:$0xff]
      %v1214 = vld [vmem:[%s1092 + $0x7f] sm:$0xff]
      %v1215 = vld [vmem:[%s1092 + $0x97] sm:$0xff]
      %v1216 = vld [vmem:[%s1092 + $0xaf] sm:$0xff]
      %v1217 = vld [vmem:[%s1092 + $0x8] sm:$0xff]
      %v1218 = vld [vmem:[%s1092 + $0x20] sm:$0xff]
      %v1219 = vld [vmem:[%s1092 + $0x38] sm:$0xff]
      %v1220 = vld [vmem:[%s1092 + $0x50] sm:$0xff]
      %v1221 = vld [vmem:[%s1092 + $0x68] sm:$0xff]
      %v1222 = vld [vmem:[%s1092 + $0x80] sm:$0xff]
      %v1223 = vld [vmem:[%s1092 + $0x98] sm:$0xff]
      %v1224 = vld [vmem:[%s1092 + $0xb0] sm:$0xff]
      %v1225 = vld [vmem:[%s1092 + $0x9] sm:$0xff]
      %v1226 = vld [vmem:[%s1092 + $0x21] sm:$0xff]
      %v1227 = vld [vmem:[%s1092 + $0x39] sm:$0xff]
      %v1228 = vld [vmem:[%s1092 + $0x51] sm:$0xff]
      %v1229 = vld [vmem:[%s1092 + $0x69] sm:$0xff]
      %v1230 = vld [vmem:[%s1092 + $0x81] sm:$0xff]
      %v1231 = vld [vmem:[%s1092 + $0x99] sm:$0xff]
      %v1232 = vld [vmem:[%s1092 + $0xb1] sm:$0xff]
      %1241 = vrot.lane.b32.xlu0 %v1217, 8
      %v1242 = vpop.permute.xlu0 %1241
      %1243 = vrot.lane.b32.xlu0 %v1218, 8
      %v1244 = vpop.permute.xlu0 %1243
      %1245 = vrot.lane.b32.xlu0 %v1219, 8
      %v1246 = vpop.permute.xlu0 %1245
      %1247 = vrot.lane.b32.xlu0 %v1220, 8
      %v1248 = vpop.permute.xlu0 %1247
      %1249 = vrot.lane.b32.xlu0 %v1221, 8
      %v1250 = vpop.permute.xlu0 %1249
      %1251 = vrot.lane.b32.xlu0 %v1222, 8
      %v1252 = vpop.permute.xlu0 %1251
      %1253 = vrot.lane.b32.xlu0 %v1223, 8
      %v1254 = vpop.permute.xlu0 %1253
      %1255 = vrot.lane.b32.xlu0 %v1224, 8
      %v1256 = vpop.permute.xlu0 %1255
      %1273 = vrot.lane.b32.xlu0 %v1225, 16
      %v1274 = vpop.permute.xlu0 %1273
      %1275 = vrot.lane.b32.xlu0 %v1226, 16
      %v1276 = vpop.permute.xlu0 %1275
      %1277 = vrot.lane.b32.xlu0 %v1227, 16
      %v1278 = vpop.permute.xlu0 %1277
      %1279 = vrot.lane.b32.xlu0 %v1228, 16
      %v1280 = vpop.permute.xlu0 %1279
      %1281 = vrot.lane.b32.xlu0 %v1229, 16
      %v1282 = vpop.permute.xlu0 %1281
      %1283 = vrot.lane.b32.xlu0 %v1230, 16
      %v1284 = vpop.permute.xlu0 %1283
      %1285 = vrot.lane.b32.xlu0 %v1231, 16
      %v1286 = vpop.permute.xlu0 %1285
      %1287 = vrot.lane.b32.xlu0 %v1232, 16
      %v1288 = vpop.permute.xlu0 %1287
      %v1297 = vsel %vm416, %v1209, %v1242
      %v1298 = vsel %vm416, %v1210, %v1244
      %v1299 = vsel %vm416, %v1211, %v1246
      %v1300 = vsel %vm416, %v1212, %v1248
      %v1301 = vsel %vm416, %v1213, %v1250
      %v1302 = vsel %vm416, %v1214, %v1252
      %v1303 = vsel %vm416, %v1215, %v1254
      %v1304 = vsel %vm416, %v1216, %v1256
      %v1305 = vsel %vm1197, %v1297, %v1274
      %v1306 = vsel %vm1197, %v1298, %v1276
      %v1307 = vsel %vm1197, %v1299, %v1278
      %v1308 = vsel %vm1197, %v1300, %v1280
      %v1309 = vsel %vm1197, %v1301, %v1282
      %v1310 = vsel %vm1197, %v1302, %v1284
      %v1311 = vsel %vm1197, %v1303, %v1286
      %v1312 = vsel %vm1197, %v1304, %v1288
      %v1313 = vld [vmem:[%s3 + $0x18] sm:$0xff]
      %v1314 = vld [vmem:[%s3 + $0x20] sm:$0xff]
      %v1315 = vld [vmem:[%s3 + $0x28] sm:$0xff]
      %vm1316 = vcmask 195584
      %v1318 = vsel %vm1316, %v1305, 0
      %v1321 = vsel %vm1316, %v1306, 0
      %v1324 = vsel %vm1316, %v1307, 0
      %v1327 = vsel %vm1316, %v1308, 0
      %v1330 = vsel %vm1316, %v1309, 0
      %v1333 = vsel %vm1316, %v1310, 0
      %v1336 = vsel %vm1316, %v1311, 0
      %v1339 = vsel %vm1316, %v1312, 0
      %1341 = vmatprep.subr.mxu0 0.0
      %1342 = vmatpush1.msra.mxu0 %v1313
      %1343 = vmatprep.subr.mxu0 0.0
      %1344 = vmatpush1.msra.mxu0 %v1314
      %1345 = vmatprep.subr.mxu0 0.0
      %1346 = vmatpush1.msra.mxu0 %v1315
      %1347 = vmatprep.subr.mxu0 0.0
      %1348 = vmatpush1.msra.mxu0 0.0
      %1349 = vmatprep.subr.mxu0 0.0
      %1350 = vmatpush1.msra.mxu0 0.0
      %1351 = vmatprep.subr.mxu0 0.0
      %1352 = vmatpush1.msra.mxu0 0.0
      %1353 = vmatprep.subr.mxu0 0.0
      %1354 = vmatpush1.msra.mxu0 0.0
      %1355 = vmatprep.subr.mxu0 0.0
      %1356 = vmatpush1.msra.mxu0 0.0
      %1357 = vmatprep.subr.mxu0 0.0
      %1358 = vmatpush1.msra.mxu0 0.0
      %1359 = vmatprep.subr.mxu0 0.0
      %1360 = vmatpush1.msra.mxu0 0.0
      %1361 = vmatprep.subr.mxu0 0.0
      %1362 = vmatpush1.msra.mxu0 0.0
      %1363 = vmatprep.subr.mxu0 0.0
      %1364 = vmatpush1.msra.mxu0 0.0
      %1365 = vmatprep.subr.mxu0 0.0
      %1366 = vmatpush1.msra.mxu0 0.0
      %1367 = vmatprep.subr.mxu0 0.0
      %1368 = vmatpush1.msra.mxu0 0.0
      %1369 = vmatprep.subr.mxu0 0.0
      %1370 = vmatpush1.msra.mxu0 0.0
      %1371 = vmatprep.subr.mxu0 0.0
      %1372 = vmatpush1.msra.mxu0 0.0
      %1373 = vmatprep.subr.mxu0 0.0
      %1374 = vmatpush1.msra.mxu0 0.0
      %1375 = vmatprep.subr.mxu0 0.0
      %1376 = vmatpush1.msra.mxu0 0.0
      %1377 = vmatprep.subr.mxu0 0.0
      %1378 = vmatpush1.msra.mxu0 0.0
      %1379 = vmatprep.subr.mxu0 0.0
      %1380 = vmatpush1.msra.mxu0 0.0
      %1381 = vmatprep.subr.mxu0 0.0
      %1382 = vmatpush1.msra.mxu0 0.0
      %1383 = vmatprep.subr.mxu0 0.0
      %1384 = vmatpush1.msra.mxu0 0.0
      %1385 = vmatprep.subr.mxu0 0.0
      %1386 = vmatpush1.msra.mxu0 0.0
      %1387 = vmatprep.subr.mxu0 0.0
      %1388 = vmatpush1.msra.mxu0 0.0
      %1389 = vmatprep.subr.mxu0 0.0
      %1390 = vmatpush1.msra.mxu0 0.0
      %1391 = vmatprep.subr.mxu0 0.0
      %1392 = vmatpush1.msra.mxu0 0.0
      %1393 = vmatprep.subr.mxu0 0.0
      %1394 = vmatpush1.msra.mxu0 0.0
      %1395 = vmatprep.subr.mxu0 0.0
      %1396 = vmatpush1.msra.mxu0 0.0
      %1397 = vmatprep.subr.mxu0 0.0
      %1398 = vmatpush1.msra.mxu0 0.0
      %1399 = vmatprep.subr.mxu0 0.0
      %1400 = vmatpush1.msra.mxu0 0.0
      %1401 = vmatprep.subr.mxu0 0.0
      %1402 = vmatpush1.msra.mxu0 0.0
      %1403 = vmatprep.subr.mxu0 0.0
      %1404 = vmatpush1.msra.mxu0 0.0
      %1405 = vmatprep.mubr.f32.mxu0 0.0
      %1406 = vmatmul.mubr.f32.gmra.mrb[0].mxu0 %v1318
      %v1407 = vpop.f32.mrb[0].mxu0
      %v1408 = vadd.f32 0.0, %v1407
      %v1409 = vpop.f32.mrb[0].mxu0
      %1410 = vmatprep.mubr.f32.mxu0 0.0
      %1411 = vmatmul.mubr.f32.gmra.mrb[0].mxu0 %v1321
      %v1412 = vpop.f32.mrb[0].mxu0
      %v1413 = vadd.f32 0.0, %v1412
      %v1414 = vpop.f32.mrb[0].mxu0
      %1415 = vmatprep.mubr.f32.mxu0 0.0
      %1416 = vmatmul.mubr.f32.gmra.mrb[0].mxu0 %v1324
      %v1417 = vpop.f32.mrb[0].mxu0
      %v1418 = vadd.f32 0.0, %v1417
      %v1419 = vpop.f32.mrb[0].mxu0
      %1420 = vmatprep.mubr.f32.mxu0 0.0
      %1421 = vmatmul.mubr.f32.gmra.mrb[0].mxu0 %v1327
      %v1422 = vpop.f32.mrb[0].mxu0
      %v1423 = vadd.f32 0.0, %v1422
      %v1424 = vpop.f32.mrb[0].mxu0
      %1425 = vmatprep.mubr.f32.mxu0 0.0
      %1426 = vmatmul.mubr.f32.gmra.mrb[0].mxu0 %v1330
      %v1427 = vpop.f32.mrb[0].mxu0
      %v1428 = vadd.f32 0.0, %v1427
      %v1429 = vpop.f32.mrb[0].mxu0
      %1430 = vmatprep.mubr.f32.mxu0 0.0
      %1431 = vmatmul.mubr.f32.gmra.mrb[0].mxu0 %v1333
      %v1432 = vpop.f32.mrb[0].mxu0
      %v1433 = vadd.f32 0.0, %v1432
      %v1434 = vpop.f32.mrb[0].mxu0
      %1435 = vmatprep.mubr.f32.mxu0 0.0
      %1436 = vmatmul.mubr.f32.gmra.mrb[0].mxu0 %v1336
      %v1437 = vpop.f32.mrb[0].mxu0
      %v1438 = vadd.f32 0.0, %v1437
      %v1439 = vpop.f32.mrb[0].mxu0
      %1440 = vmatprep.mubr.f32.mxu0 0.0
      %1441 = vmatmul.mubr.f32.gmra.mrb[0].mxu0 %v1339
      %v1442 = vpop.f32.mrb[0].mxu0
      %v1443 = vadd.f32 0.0, %v1442
      %v1444 = vpop.f32.mrb[0].mxu0
      %1445 = vdwg.mxu0
      %v1447 = vsel %vm1316, %v1198, 0
      %v1450 = vsel %vm1316, %v1199, 0
      %v1453 = vsel %vm1316, %v1200, 0
      %v1456 = vsel %vm1316, %v1201, 0
      %v1459 = vsel %vm1316, %v1202, 0
      %v1462 = vsel %vm1316, %v1203, 0
      %v1465 = vsel %vm1316, %v1204, 0
      %v1468 = vsel %vm1316, %v1205, 0
      %1470 = vmatprep.subr.mxu0 0.0
      %1471 = vmatpush1.msra.mxu0 %v1206
      %1472 = vmatprep.subr.mxu0 0.0
      %1473 = vmatpush1.msra.mxu0 %v1207
      %1474 = vmatprep.subr.mxu0 0.0
      %1475 = vmatpush1.msra.mxu0 %v1208
      %1476 = vmatprep.subr.mxu0 0.0
      %1477 = vmatpush1.msra.mxu0 0.0
      %1478 = vmatprep.subr.mxu0 0.0
      %1479 = vmatpush1.msra.mxu0 0.0
      %1480 = vmatprep.subr.mxu0 0.0
      %1481 = vmatpush1.msra.mxu0 0.0
      %1482 = vmatprep.subr.mxu0 0.0
      %1483 = vmatpush1.msra.mxu0 0.0
      %1484 = vmatprep.subr.mxu0 0.0
      %1485 = vmatpush1.msra.mxu0 0.0
      %1486 = vmatprep.subr.mxu0 0.0
      %1487 = vmatpush1.msra.mxu0 0.0
      %1488 = vmatprep.subr.mxu0 0.0
      %1489 = vmatpush1.msra.mxu0 0.0
      %1490 = vmatprep.subr.mxu0 0.0
      %1491 = vmatpush1.msra.mxu0 0.0
      %1492 = vmatprep.subr.mxu0 0.0
      %1493 = vmatpush1.msra.mxu0 0.0
      %1494 = vmatprep.subr.mxu0 0.0
      %1495 = vmatpush1.msra.mxu0 0.0
      %1496 = vmatprep.subr.mxu0 0.0
      %1497 = vmatpush1.msra.mxu0 0.0
      %1498 = vmatprep.subr.mxu0 0.0
      %1499 = vmatpush1.msra.mxu0 0.0
      %1500 = vmatprep.subr.mxu0 0.0
      %1501 = vmatpush1.msra.mxu0 0.0
      %1502 = vmatprep.subr.mxu0 0.0
      %1503 = vmatpush1.msra.mxu0 0.0
      %1504 = vmatprep.subr.mxu0 0.0
      %1505 = vmatpush1.msra.mxu0 0.0
      %1506 = vmatprep.subr.mxu0 0.0
      %1507 = vmatpush1.msra.mxu0 0.0
      %1508 = vmatprep.subr.mxu0 0.0
      %1509 = vmatpush1.msra.mxu0 0.0
      %1510 = vmatprep.subr.mxu0 0.0
      %1511 = vmatpush1.msra.mxu0 0.0
      %1512 = vmatprep.subr.mxu0 0.0
      %1513 = vmatpush1.msra.mxu0 0.0
      %1514 = vmatprep.subr.mxu0 0.0
      %1515 = vmatpush1.msra.mxu0 0.0
      %1516 = vmatprep.subr.mxu0 0.0
      %1517 = vmatpush1.msra.mxu0 0.0
      %1518 = vmatprep.subr.mxu0 0.0
      %1519 = vmatpush1.msra.mxu0 0.0
      %1520 = vmatprep.subr.mxu0 0.0
      %1521 = vmatpush1.msra.mxu0 0.0
      %1522 = vmatprep.subr.mxu0 0.0
      %1523 = vmatpush1.msra.mxu0 0.0
      %1524 = vmatprep.subr.mxu0 0.0
      %1525 = vmatpush1.msra.mxu0 0.0
      %1526 = vmatprep.subr.mxu0 0.0
      %1527 = vmatpush1.msra.mxu0 0.0
      %1528 = vmatprep.subr.mxu0 0.0
      %1529 = vmatpush1.msra.mxu0 0.0
      %1530 = vmatprep.subr.mxu0 0.0
      %1531 = vmatpush1.msra.mxu0 0.0
      %1532 = vmatprep.subr.mxu0 0.0
      %1533 = vmatpush1.msra.mxu0 0.0
      %1534 = vmatprep.mubr.f32.mxu0 0.0
      %1535 = vmatmul.mubr.f32.gmra.mrb[0].mxu0 %v1447
      %v1536 = vpop.f32.mrb[0].mxu0
      %v1537 = vadd.f32 %v1408, %v1536
      %v1538 = vpop.f32.mrb[0].mxu0
      %1539 = vmatprep.mubr.f32.mxu0 0.0
      %1540 = vmatmul.mubr.f32.gmra.mrb[0].mxu0 %v1450
      %v1541 = vpop.f32.mrb[0].mxu0
      %v1542 = vadd.f32 %v1413, %v1541
      %v1543 = vpop.f32.mrb[0].mxu0
      %1544 = vmatprep.mubr.f32.mxu0 0.0
      %1545 = vmatmul.mubr.f32.gmra.mrb[0].mxu0 %v1453
      %v1546 = vpop.f32.mrb[0].mxu0
      %v1547 = vadd.f32 %v1418, %v1546
      %v1548 = vpop.f32.mrb[0].mxu0
      %1549 = vmatprep.mubr.f32.mxu0 0.0
      %1550 = vmatmul.mubr.f32.gmra.mrb[0].mxu0 %v1456
      %v1551 = vpop.f32.mrb[0].mxu0
      %v1552 = vadd.f32 %v1423, %v1551
      %v1553 = vpop.f32.mrb[0].mxu0
      %1554 = vmatprep.mubr.f32.mxu0 0.0
      %1555 = vmatmul.mubr.f32.gmra.mrb[0].mxu0 %v1459
      %v1556 = vpop.f32.mrb[0].mxu0
      %v1557 = vadd.f32 %v1428, %v1556
      %v1558 = vpop.f32.mrb[0].mxu0
      %1559 = vmatprep.mubr.f32.mxu0 0.0
      %1560 = vmatmul.mubr.f32.gmra.mrb[0].mxu0 %v1462
      %v1561 = vpop.f32.mrb[0].mxu0
      %v1562 = vadd.f32 %v1433, %v1561
      %v1563 = vpop.f32.mrb[0].mxu0
      %1564 = vmatprep.mubr.f32.mxu0 0.0
      %1565 = vmatmul.mubr.f32.gmra.mrb[0].mxu0 %v1465
      %v1566 = vpop.f32.mrb[0].mxu0
      %v1567 = vadd.f32 %v1438, %v1566
      %v1568 = vpop.f32.mrb[0].mxu0
      %1569 = vmatprep.mubr.f32.mxu0 0.0
      %1570 = vmatmul.mubr.f32.gmra.mrb[0].mxu0 %v1468
      %v1571 = vpop.f32.mrb[0].mxu0
      %v1572 = vadd.f32 %v1443, %v1571
      %v1573 = vpop.f32.mrb[0].mxu0
      %1574 = vdwg.mxu0
      %s1575 = scalar_lea.vmem [#allocation3], 48
      %v1576 = vld [vmem:[%s1575 + $0x7] sm:$0xff]
      %v1577 = vld [vmem:[%s1575 + $0x1f] sm:$0xff]
      %v1578 = vld [vmem:[%s1575 + $0x37] sm:$0xff]
      %v1579 = vld [vmem:[%s1575 + $0x4f] sm:$0xff]
      %v1580 = vld [vmem:[%s1575 + $0x67] sm:$0xff]
      %v1581 = vld [vmem:[%s1575 + $0x7f] sm:$0xff]
      %v1582 = vld [vmem:[%s1575 + $0x97] sm:$0xff]
      %v1583 = vld [vmem:[%s1575 + $0xaf] sm:$0xff]
      %v1584 = vld [vmem:[%s1575 + $0x8] sm:$0xff]
      %v1585 = vld [vmem:[%s1575 + $0x20] sm:$0xff]
      %v1586 = vld [vmem:[%s1575 + $0x38] sm:$0xff]
      %v1587 = vld [vmem:[%s1575 + $0x50] sm:$0xff]
      %v1588 = vld [vmem:[%s1575 + $0x68] sm:$0xff]
      %v1589 = vld [vmem:[%s1575 + $0x80] sm:$0xff]
      %v1590 = vld [vmem:[%s1575 + $0x98] sm:$0xff]
      %v1591 = vld [vmem:[%s1575 + $0xb0] sm:$0xff]
      %v1592 = vld [vmem:[%s1575 + $0x9] sm:$0xff]
      %v1593 = vld [vmem:[%s1575 + $0x21] sm:$0xff]
      %v1594 = vld [vmem:[%s1575 + $0x39] sm:$0xff]
      %v1595 = vld [vmem:[%s1575 + $0x51] sm:$0xff]
      %v1596 = vld [vmem:[%s1575 + $0x69] sm:$0xff]
      %v1597 = vld [vmem:[%s1575 + $0x81] sm:$0xff]
      %v1598 = vld [vmem:[%s1575 + $0x99] sm:$0xff]
      %v1599 = vld [vmem:[%s1575 + $0xb1] sm:$0xff]
      %1608 = vrot.lane.b32.xlu0 %v1584, 8
      %v1609 = vpop.permute.xlu0 %1608
      %1610 = vrot.lane.b32.xlu0 %v1585, 8
      %v1611 = vpop.permute.xlu0 %1610
      %1612 = vrot.lane.b32.xlu0 %v1586, 8
      %v1613 = vpop.permute.xlu0 %1612
      %1614 = vrot.lane.b32.xlu0 %v1587, 8
      %v1615 = vpop.permute.xlu0 %1614
      %1616 = vrot.lane.b32.xlu0 %v1588, 8
      %v1617 = vpop.permute.xlu0 %1616
      %1618 = vrot.lane.b32.xlu0 %v1589, 8
      %v1619 = vpop.permute.xlu0 %1618
      %1620 = vrot.lane.b32.xlu0 %v1590, 8
      %v1621 = vpop.permute.xlu0 %1620
      %1622 = vrot.lane.b32.xlu0 %v1591, 8
      %v1623 = vpop.permute.xlu0 %1622
      %1640 = vrot.lane.b32.xlu0 %v1592, 16
      %v1641 = vpop.permute.xlu0 %1640
      %1642 = vrot.lane.b32.xlu0 %v1593, 16
      %v1643 = vpop.permute.xlu0 %1642
      %1644 = vrot.lane.b32.xlu0 %v1594, 16
      %v1645 = vpop.permute.xlu0 %1644
      %1646 = vrot.lane.b32.xlu0 %v1595, 16
      %v1647 = vpop.permute.xlu0 %1646
      %1648 = vrot.lane.b32.xlu0 %v1596, 16
      %v1649 = vpop.permute.xlu0 %1648
      %1650 = vrot.lane.b32.xlu0 %v1597, 16
      %v1651 = vpop.permute.xlu0 %1650
      %1652 = vrot.lane.b32.xlu0 %v1598, 16
      %v1653 = vpop.permute.xlu0 %1652
      %1654 = vrot.lane.b32.xlu0 %v1599, 16
      %v1655 = vpop.permute.xlu0 %1654
      %v1664 = vsel %vm416, %v1576, %v1609
      %v1665 = vsel %vm416, %v1577, %v1611
      %v1666 = vsel %vm416, %v1578, %v1613
      %v1667 = vsel %vm416, %v1579, %v1615
      %v1668 = vsel %vm416, %v1580, %v1617
      %v1669 = vsel %vm416, %v1581, %v1619
      %v1670 = vsel %vm416, %v1582, %v1621
      %v1671 = vsel %vm416, %v1583, %v1623
      %v1672 = vsel %vm1197, %v1664, %v1641
      %v1673 = vsel %vm1197, %v1665, %v1643
      %v1674 = vsel %vm1197, %v1666, %v1645
      %v1675 = vsel %vm1197, %v1667, %v1647
      %v1676 = vsel %vm1197, %v1668, %v1649
      %v1677 = vsel %vm1197, %v1669, %v1651
      %v1678 = vsel %vm1197, %v1670, %v1653
      %v1679 = vsel %vm1197, %v1671, %v1655
      %v1680 = vld [vmem:[%s3 + $0x30] sm:$0xff]
      %v1681 = vld [vmem:[%s3 + $0x38] sm:$0xff]
      %v1682 = vld [vmem:[%s3 + $0x40] sm:$0xff]
      %v1684 = vsel %vm1316, %v1672, 0
      %v1687 = vsel %vm1316, %v1673, 0
      %v1690 = vsel %vm1316, %v1674, 0
      %v1693 = vsel %vm1316, %v1675, 0
      %v1696 = vsel %vm1316, %v1676, 0
      %v1699 = vsel %vm1316, %v1677, 0
      %v1702 = vsel %vm1316, %v1678, 0
      %v1705 = vsel %vm1316, %v1679, 0
      %1707 = vmatprep.subr.mxu0 0.0
      %1708 = vmatpush1.msra.mxu0 %v1680
      %1709 = vmatprep.subr.mxu0 0.0
      %1710 = vmatpush1.msra.mxu0 %v1681
      %1711 = vmatprep.subr.mxu0 0.0
      %1712 = vmatpush1.msra.mxu0 %v1682
      %1713 = vmatprep.subr.mxu0 0.0
      %1714 = vmatpush1.msra.mxu0 0.0
      %1715 = vmatprep.subr.mxu0 0.0
      %1716 = vmatpush1.msra.mxu0 0.0
      %1717 = vmatprep.subr.mxu0 0.0
      %1718 = vmatpush1.msra.mxu0 0.0
      %1719 = vmatprep.subr.mxu0 0.0
      %1720 = vmatpush1.msra.mxu0 0.0
      %1721 = vmatprep.subr.mxu0 0.0
      %1722 = vmatpush1.msra.mxu0 0.0
      %1723 = vmatprep.subr.mxu0 0.0
      %1724 = vmatpush1.msra.mxu0 0.0
      %1725 = vmatprep.subr.mxu0 0.0
      %1726 = vmatpush1.msra.mxu0 0.0
      %1727 = vmatprep.subr.mxu0 0.0
      %1728 = vmatpush1.msra.mxu0 0.0
      %1729 = vmatprep.subr.mxu0 0.0
      %1730 = vmatpush1.msra.mxu0 0.0
      %1731 = vmatprep.subr.mxu0 0.0
      %1732 = vmatpush1.msra.mxu0 0.0
      %1733 = vmatprep.subr.mxu0 0.0
      %1734 = vmatpush1.msra.mxu0 0.0
      %1735 = vmatprep.subr.mxu0 0.0
      %1736 = vmatpush1.msra.mxu0 0.0
      %1737 = vmatprep.subr.mxu0 0.0
      %1738 = vmatpush1.msra.mxu0 0.0
      %1739 = vmatprep.subr.mxu0 0.0
      %1740 = vmatpush1.msra.mxu0 0.0
      %1741 = vmatprep.subr.mxu0 0.0
      %1742 = vmatpush1.msra.mxu0 0.0
      %1743 = vmatprep.subr.mxu0 0.0
      %1744 = vmatpush1.msra.mxu0 0.0
      %1745 = vmatprep.subr.mxu0 0.0
      %1746 = vmatpush1.msra.mxu0 0.0
      %1747 = vmatprep.subr.mxu0 0.0
      %1748 = vmatpush1.msra.mxu0 0.0
      %1749 = vmatprep.subr.mxu0 0.0
      %1750 = vmatpush1.msra.mxu0 0.0
      %1751 = vmatprep.subr.mxu0 0.0
      %1752 = vmatpush1.msra.mxu0 0.0
      %1753 = vmatprep.subr.mxu0 0.0
      %1754 = vmatpush1.msra.mxu0 0.0
      %1755 = vmatprep.subr.mxu0 0.0
      %1756 = vmatpush1.msra.mxu0 0.0
      %1757 = vmatprep.subr.mxu0 0.0
      %1758 = vmatpush1.msra.mxu0 0.0
      %1759 = vmatprep.subr.mxu0 0.0
      %1760 = vmatpush1.msra.mxu0 0.0
      %1761 = vmatprep.subr.mxu0 0.0
      %1762 = vmatpush1.msra.mxu0 0.0
      %1763 = vmatprep.subr.mxu0 0.0
      %1764 = vmatpush1.msra.mxu0 0.0
      %1765 = vmatprep.subr.mxu0 0.0
      %1766 = vmatpush1.msra.mxu0 0.0
      %1767 = vmatprep.subr.mxu0 0.0
      %1768 = vmatpush1.msra.mxu0 0.0
      %1769 = vmatprep.subr.mxu0 0.0
      %1770 = vmatpush1.msra.mxu0 0.0
      %1771 = vmatprep.mubr.f32.mxu0 0.0
      %1772 = vmatmul.mubr.f32.gmra.mrb[0].mxu0 %v1684
      %v1773 = vpop.f32.mrb[0].mxu0
      %v1774 = vadd.f32 0.0, %v1773
      %v1775 = vpop.f32.mrb[0].mxu0
      %1776 = vmatprep.mubr.f32.mxu0 0.0
      %1777 = vmatmul.mubr.f32.gmra.mrb[0].mxu0 %v1687
      %v1778 = vpop.f32.mrb[0].mxu0
      %v1779 = vadd.f32 0.0, %v1778
      %v1780 = vpop.f32.mrb[0].mxu0
      %1781 = vmatprep.mubr.f32.mxu0 0.0
      %1782 = vmatmul.mubr.f32.gmra.mrb[0].mxu0 %v1690
      %v1783 = vpop.f32.mrb[0].mxu0
      %v1784 = vadd.f32 0.0, %v1783
      %v1785 = vpop.f32.mrb[0].mxu0
      %1786 = vmatprep.mubr.f32.mxu0 0.0
      %1787 = vmatmul.mubr.f32.gmra.mrb[0].mxu0 %v1693
      %v1788 = vpop.f32.mrb[0].mxu0
      %v1789 = vadd.f32 0.0, %v1788
      %v1790 = vpop.f32.mrb[0].mxu0
      %1791 = vmatprep.mubr.f32.mxu0 0.0
      %1792 = vmatmul.mubr.f32.gmra.mrb[0].mxu0 %v1696
      %v1793 = vpop.f32.mrb[0].mxu0
      %v1794 = vadd.f32 0.0, %v1793
      %v1795 = vpop.f32.mrb[0].mxu0
      %1796 = vmatprep.mubr.f32.mxu0 0.0
      %1797 = vmatmul.mubr.f32.gmra.mrb[0].mxu0 %v1699
      %v1798 = vpop.f32.mrb[0].mxu0
      %v1799 = vadd.f32 0.0, %v1798
      %v1800 = vpop.f32.mrb[0].mxu0
      %1801 = vmatprep.mubr.f32.mxu0 0.0
      %1802 = vmatmul.mubr.f32.gmra.mrb[0].mxu0 %v1702
      %v1803 = vpop.f32.mrb[0].mxu0
      %v1804 = vadd.f32 0.0, %v1803
      %v1805 = vpop.f32.mrb[0].mxu0
      %1806 = vmatprep.mubr.f32.mxu0 0.0
      %1807 = vmatmul.mubr.f32.gmra.mrb[0].mxu0 %v1705
      %v1808 = vpop.f32.mrb[0].mxu0
      %v1809 = vadd.f32 0.0, %v1808
      %v1810 = vpop.f32.mrb[0].mxu0
      %1811 = vdwg.mxu0
      %v1812 = vadd.f32 %v1537, %v1774
      %v1813 = vadd.f32 %v1542, %v1779
      %v1814 = vadd.f32 %v1547, %v1784
      %v1815 = vadd.f32 %v1552, %v1789
      %v1816 = vadd.f32 %v1557, %v1794
      %v1817 = vadd.f32 %v1562, %v1799
      %v1818 = vadd.f32 %v1567, %v1804
      %v1819 = vadd.f32 %v1572, %v1809
      %v1820 = vld [vmem:[%s4] sm:$0x1]
      %v1822 = vlaneseq
      %v1823 = vshrl.u32 %v1822, 7
      %v1824 = vsub.s32 0, %v1823
      %v1825 = vrot.slane %v1820, %v1824
      %v1827 = vadd.f32 %v1812, %v1825
      %v1828 = vadd.f32 %v1813, %v1825
      %v1829 = vadd.f32 %v1814, %v1825
      %v1830 = vadd.f32 %v1815, %v1825
      %v1831 = vadd.f32 %v1816, %v1825
      %v1832 = vadd.f32 %v1817, %v1825
      %v1833 = vadd.f32 %v1818, %v1825
      %v1834 = vadd.f32 %v1819, %v1825
      %v1835 = vmax.f32 %v1827, 0.0
      %v1836 = vmax.f32 %v1828, 0.0
      %v1837 = vmax.f32 %v1829, 0.0
      %v1838 = vmax.f32 %v1830, 0.0
      %v1839 = vmax.f32 %v1831, 0.0
      %v1840 = vmax.f32 %v1832, 0.0
      %v1841 = vmax.f32 %v1833, 0.0
      %v1842 = vmax.f32 %v1834, 0.0
      %1843 = vxpose.xlu0.b32.start [1/16] %v1835, 128
      %1844 = vxpose.xlu0.b32.cont [2/16] %v1836, 128
      %1845 = vxpose.xlu0.b32.cont [3/16] %v1837, 128
      %1846 = vxpose.xlu0.b32.cont [4/16] %v1838, 128
      %1847 = vxpose.xlu0.b32.cont [5/16] %v1839, 128
      %1848 = vxpose.xlu0.b32.cont [6/16] %v1840, 128
      %1849 = vxpose.xlu0.b32.cont [7/16] %v1841, 128
      %1850 = vxpose.xlu0.b32.cont [8/16] %v1842, 128
      %1851 = vxpose.xlu0.b32.cont [9/16] 0.0, 128
      %1852 = vxpose.xlu0.b32.cont [10/16] 0.0, 128
      %1853 = vxpose.xlu0.b32.cont [11/16] 0.0, 128
      %1854 = vxpose.xlu0.b32.cont [12/16] 0.0, 128
      %1855 = vxpose.xlu0.b32.cont [13/16] 0.0, 128
      %1856 = vxpose.xlu0.b32.cont [14/16] 0.0, 128
      %1857 = vxpose.xlu0.b32.cont [15/16] 0.0, 128
      %1858 = vxpose.xlu0.b32.end [16/16] 0.0, 128
      %v1859 = vpop.trf.xlu0
      %v1860 = vpop.trf.xlu0
      %v1861 = vpop.trf.xlu0
      %v1862 = vpop.trf.xlu0
      %v1863 = vpop.trf.xlu0
      %v1864 = vpop.trf.xlu0
      %v1865 = vpop.trf.xlu0
      %v1866 = vpop.trf.xlu0
      %v1867 = vpop.trf.xlu0
      %v1868 = vpop.trf.xlu0
      %v1869 = vpop.trf.xlu0
      %v1870 = vpop.trf.xlu0
      %v1871 = vpop.trf.xlu0
      %v1872 = vpop.trf.xlu0
      %v1873 = vpop.trf.xlu0
      %v1874 = vpop.trf.xlu0
      %vm1875 = vcmask 523264
      %1876 = vst.msk [vmem:[%s222] sm:$0xff] %vm1875, %v1859
      %p1877 = scmp.lt.s32.totalorder %s16, 1
      %s1878 = scalar_select %p1877, %s16, 1
      %s1879 = smul.addr %s1878, 8
      %s1880 = scalar_lea.vmem %s5, %s1879
      // Predicated region
      $region41: #{down_forward.1} parent=39 // pred_check
        %p1881 = pneg %p144
      $region42: #{down_forward.1} parent=39 // pred_check_branch
        %1883 = sbr.rel (%p1881) target = $region44
      $region43: #{down_forward.1} parent=39 // pred_region
        _
      $region44: #{down_forward.1} parent=39 // pred_fallthru
        _
    $region40: #{down_forward.1} parent=5 // pred_fallthru
      _
    %p1884 = scmp.le.s32.totalorder 2, %s11
    // Predicated region
    $region45: #{down_forward.1} parent=5 // pred_check
      %p1885 = pneg %p1884
    $region46: #{down_forward.1} parent=5 // pred_check_branch
      %1887 = sbr.rel (%p1885) target = $region48
    $region47: #{down_forward.1} parent=5 // pred_region
      %s1888 = ssub.s32 %s11, 2
      // Predicated region
      $region49: #{down_forward.1} parent=47 // pred_check
        %p1889 = pneg %p150
      $region50: #{down_forward.1} parent=47 // pred_check_branch
        %1891 = sbr.rel (%p1889) target = $region52
      $region51: #{down_forward.1} parent=47 // pred_region
        %p1892 = scmp.lt.s32.totalorder %s17, 1
        %s1893 = scalar_select %p1892, %s17, 1
        %s1894 = smul.addr %s1893, 8
        %s1895 = scalar_lea.vmem %s5, %s1894
      $region52: #{down_forward.1} parent=47 // pred_fallthru
        _
    $region48: #{down_forward.1} parent=5 // pred_fallthru
      _
  $region6: #{down_forward.1} parent=0 // loop_footer
    %s15 = sadd.s32 1, %s11
  $region7: #{down_forward.1} parent=0 // loop_footer_branch
    %10 = sbr.rel target = $region3
  $region8: #{down_forward.1} parent=0 // loop_exit
    _

</llo_original>
